<compile_context>
chip_gen: v7x
topology: tpu7x:2x2x1
jax: 0.10.0
libtpu: 0.0.40
codegen_flags: <defaults>
</compile_context>

<pallas_src>
import functools
import numpy as np
import jax
import jax.numpy as jnp
from jax.experimental import pallas as pl
from jax.experimental.pallas import tpu as pltpu


def _round_up(v: int, m: int) -> int:
    return (v + m - 1) // m * m


# ---------------------------------------------------------------------------
# interpolation matrices (linear, align_corners=False)
# ---------------------------------------------------------------------------
def _interp_matrix_np(t_in: int, t_out: int) -> np.ndarray:
    """NumPy matrix M (t_out, t_in): M @ x == F.interpolate(x, size=t_out, mode='linear')."""
    j = np.arange(t_out, dtype=np.float64)
    scale = t_in / t_out
    coord = np.clip((j + 0.5) * scale - 0.5, 0.0, t_in - 1)
    lo = np.floor(coord).astype(np.int64)
    hi = np.minimum(lo + 1, t_in - 1)
    frac = coord - lo
    mat = np.zeros((t_out, t_in), dtype=np.float64)
    np.add.at(mat, (j.astype(np.int64), lo), 1.0 - frac)
    np.add.at(mat, (j.astype(np.int64), hi), frac)
    return mat.astype(np.float32)


def _interp_matrix_traced(t_in: int, t_pad: int, t_act):
    """Traced (t_pad, t_in) interpolation matrix; rows >= t_act (dynamic) are zero."""
    j = jnp.arange(t_pad, dtype=jnp.float32)
    t_act_f = t_act.astype(jnp.float32)
    scale = jnp.float32(t_in) / t_act_f
    coord = jnp.clip((j + 0.5) * scale - 0.5, 0.0, float(t_in - 1))
    lo = jnp.floor(coord).astype(jnp.int32)
    hi = jnp.minimum(lo + 1, t_in - 1)
    frac = coord - lo.astype(jnp.float32)
    w_lo = (1.0 - frac)[:, None] * jax.nn.one_hot(lo, t_in, dtype=jnp.float32)
    w_hi = frac[:, None] * jax.nn.one_hot(hi, t_in, dtype=jnp.float32)
    valid = (j < t_act_f).astype(jnp.float32)[:, None]
    return (w_lo + w_hi) * valid


# ---------------------------------------------------------------------------
# kernel
# ---------------------------------------------------------------------------
def _mish(y):
    # mish(y) = y * tanh(softplus(y)) = y * (u^2 - 1) / (u^2 + 1),  u = 1 + exp(y)
    # 1 exp + 1 approx reciprocal (EUP slots) instead of exp + log1p + tanh.
    yc = jnp.clip(y, -30.0, 20.0)
    u = 1.0 + jnp.exp(yc)
    n = u * u
    return y * (n - 1.0) * pl.reciprocal(n + 1.0, approx=True)


def regulator_kernel(ylens_ref, tact_ref,          # scalar prefetch (SMEM)
                     interp_ref,                   # (T_pad, T_in)     bf16  (whole, VMEM)
                     x_ref,                        # (1, T_in, CP)     bf16  (blocked on batch)
                     w3_ref,                       # (N, CP, 3*CP)     bf16  (whole, VMEM)
                     b3_ref, gamma_ref, beta_ref,  # (N, 1, CP)        f32   (whole, VMEM)
                     wf_ref, bf_ref,               # (CP, OCP) bf16 / (1, OCP) f32
                     out_ref,                      # (1, T_pad, OCP)   bf16  (blocked on batch)
                     *, c_real):
    b = pl.program_id(0)
    t_pad = interp_ref.shape[0]
    cp = x_ref.shape[2]                              # lane-padded channel count
    n_blocks = w3_ref.shape[0]
    eps = 1e-5

    t_act = tact_ref[0]                              # dynamic max length (== ylens.max())
    t_idx = jax.lax.broadcasted_iota(jnp.int32, (t_pad, 1), 0)
    row_valid = (t_idx < t_act).astype(jnp.float32)  # frames < ylens.max()
    first_ok = (t_idx >= 1).astype(jnp.float32)      # kills roll wrap at row 0
    last_ok = (t_idx < (t_pad - 1)).astype(jnp.float32)  # kills roll wrap at last row

    # F.interpolate as a bf16 (T_pad, T_in) @ (T_in, CP) matmul; padded rows are zero.
    h = jnp.dot(interp_ref[...], x_ref[0], preferred_element_type=jnp.float32)

    inv_cnt = 1.0 / (t_act.astype(jnp.float32) * c_real)   # real C, not the padded CP

    # static unroll over (Conv1d k=3 p=1, GroupNorm(1, C), Mish) blocks
    for n in range(n_blocks):
        hb = h.astype(jnp.bfloat16)
        # one fused matmul for all three taps: (T_pad, CP) @ (CP, 3*CP)
        mcat = jnp.dot(hb, w3_ref[n], preferred_element_type=jnp.float32)
        m0 = mcat[:, :cp]          # tap applied to h[t-1]
        m1 = mcat[:, cp:2 * cp]    # tap applied to h[t]
        m2 = mcat[:, 2 * cp:]      # tap applied to h[t+1]
        y = (m1 + b3_ref[n]
             + pltpu.roll(m0, 1, axis=0) * first_ok
             + pltpu.roll(m2, t_pad - 1, axis=0) * last_ok)

        # GroupNorm(groups=1): one-pass masked stats over the t_act valid frames.
        # Sublane-first partial reduce -> (1, CP) -> scalar (shorter reduce chain).
        ym = y * row_valid
        s1 = jnp.sum(jnp.sum(ym, axis=0, keepdims=True))
        s2 = jnp.sum(jnp.sum(ym * ym, axis=0, keepdims=True))
        mean = s1 * inv_cnt
        var = jnp.maximum(s2 * inv_cnt - mean * mean, 0.0)
        invstd = jax.lax.rsqrt(var + eps)
        a = gamma_ref[n] * invstd                  # folded affine: y*a + shift
        shift = beta_ref[n] - mean * a
        y = y * a + shift
        # re-zero padded frames so the next conv's halo sees zeros beyond t_act
        h = _mish(y) * row_valid

    # final Conv1d(C, out_C, 1) == matmul + bias (out_C lane-padded to 128*k)
    out = jnp.dot(h.astype(jnp.bfloat16), wf_ref[...],
                  preferred_element_type=jnp.float32) + bf_ref[...]

    # mask = (~make_pad_mask(ylens)).unsqueeze(-1)
    mask = (t_idx < ylens_ref[b]).astype(jnp.float32)
    out_ref[0] = (out * mask).astype(out_ref.dtype)


# ---------------------------------------------------------------------------
# wrapper
# ---------------------------------------------------------------------------
def interpolate_regulator(x, ylens, params, t_out_max=None):
    """x: (B, T_in, C) f32; ylens: (B,) int32.
    t_out_max: static output-length bucket (>= ylens.max()).  Returns (out, olens)
    with out of shape (B, t_out_max, out_c) in bf16; frames >= ylens[b] are zero."""
    B, t_in, C = x.shape
    ylens = jnp.asarray(ylens, jnp.int32)
    if t_out_max is None:
        # TODO(synk): host-side fallback (device sync + recompile per distinct max
        # length). Prefer passing a static, bucketed t_out_max for jit-friendly use.
        t_out_max = int(np.asarray(jax.device_get(ylens)).max())
    t_out_max = int(t_out_max)
    t_pad = _round_up(t_out_max, 16)                 # bf16-friendly sublane multiple
    t_act = jnp.max(ylens).astype(jnp.int32)         # traced actual max length
    t_act_arr = t_act.reshape((1,))

    interp = _interp_matrix_traced(t_in, t_pad, t_act).astype(jnp.bfloat16)
    # TODO(synk): for production T_in >> 128, replace the dense interp matmul with a
    # scalar-prefetched 2-row gather + lerp instead of a K=T_in MXU contraction.

    # ---- lane-dense channel padding (CP, OCP multiples of 128) ----
    cp = max(128, _round_up(C, 128))
    w3 = jnp.asarray(params["w3"], jnp.float32)                    # (N, 3, C, C)
    n_blocks = int(w3.shape[0])
    w3_p = jnp.pad(w3, ((0, 0), (0, 0), (0, cp - C), (0, cp - C)))
    # fuse the 3 taps along the output-channel axis -> (N, CP, 3*CP), bf16
    w3_cat = jnp.concatenate([w3_p[:, 0], w3_p[:, 1], w3_p[:, 2]],
                             axis=-1).astype(jnp.bfloat16)

    def _pad_c(a):   # (N, 1, C) -> (N, 1, CP), zero pads (keeps padded channels at 0)
        return jnp.pad(jnp.asarray(a, jnp.float32), ((0, 0), (0, 0), (0, cp - C)))

    b3 = _pad_c(params["b3"])
    gamma = _pad_c(params["gamma"])
    beta = _pad_c(params["beta"])

    wf = jnp.asarray(params["wf"], jnp.float32)                    # (C, out_c)
    bf = jnp.asarray(params["bf"], jnp.float32)                    # (1, out_c)
    out_c = int(wf.shape[1])
    ocp = max(128, _round_up(out_c, 128))                          # lane-dense output
    wf_p = jnp.pad(wf, ((0, cp - C), (0, ocp - out_c))).astype(jnp.bfloat16)
    bf_p = jnp.pad(bf, ((0, 0), (0, ocp - out_c)))

    x_p = jnp.pad(x.astype(jnp.float32),
                  ((0, 0), (0, 0), (0, cp - C))).astype(jnp.bfloat16)

    # ---- VMEM budget: constants (single copy) + pipelined blocks + temporaries ----
    def nbytes(shape, itemsize):
        return int(np.prod(shape)) * itemsize
    const_bytes = (nbytes((t_pad, t_in), 2)
                   + nbytes((n_blocks, cp, 3 * cp), 2)
                   + 3 * nbytes((n_blocks, 1, cp), 4)
                   + nbytes((cp, ocp), 2) + nbytes((1, ocp), 4))
    pipe_bytes = 2 * (nbytes((1, t_in, cp), 2) + nbytes((1, t_pad, ocp), 2))
    tmp_bytes = (nbytes((t_pad, 3 * cp), 4)              # fused conv result
                 + 8 * nbytes((t_pad, cp), 4)            # h / y / ym / mish temporaries
                 + nbytes((t_pad, ocp), 4))              # final matmul f32 result
    footprint = const_bytes + pipe_bytes + tmp_bytes
    vmem_limit = int(min(48 * 2**20, max(32 * 2**20, 2 * footprint)))

    def vmem_whole():
        # constant-index operand: keep a single whole-array copy resident in VMEM
        # (no pointless double-buffering across the batch grid).
        return pl.BlockSpec(memory_space=pltpu.MemorySpace.VMEM)

    grid_spec = pltpu.PrefetchScalarGridSpec(
        num_scalar_prefetch=2,                     # ylens, t_act  -> SMEM
        grid=(B,),
        in_specs=[
            vmem_whole(),                                            # interp
            pl.BlockSpec((1, t_in, cp), lambda b, yl, ta: (b, 0, 0)),  # x (pipelined)
            vmem_whole(),                                            # w3_cat
            vmem_whole(),                                            # b3
            vmem_whole(),                                            # gamma
            vmem_whole(),                                            # beta
            vmem_whole(),                                            # wf
            vmem_whole(),                                            # bf
        ],
        out_specs=pl.BlockSpec((1, t_pad, ocp), lambda b, yl, ta: (b, 0, 0)),
    )
    # TODO(synk): for production T_pad (and B==1 on v7x), add a time-tile grid axis
    # (two-pass GroupNorm: stats-accumulate then normalize) and mark it "parallel" so
    # both v7x TensorCores get work while keeping intermediates inside 64 MiB VMEM.
    fn = pl.pallas_call(
        functools.partial(regulator_kernel, c_real=float(C)),
        grid_spec=grid_spec,
        out_shape=jax.ShapeDtypeStruct((B, t_pad, ocp), jnp.bfloat16),
        compiler_params=pltpu.CompilerParams(
            dimension_semantics=("parallel",),      # batch elems are independent
            vmem_limit_bytes=vmem_limit),
    )
    out_full = fn(ylens, t_act_arr, interp, x_p, w3_cat, b3, gamma, beta, wf_p, bf_p)
    # drop lane/time padding in the wrapper (kernel output stays lane/sublane dense)
    return out_full[:, :t_out_max, :out_c], ylens


# ---------------------------------------------------------------------------
# pure-JAX reference (mirrors the PyTorch forward, full f32)
# ---------------------------------------------------------------------------
def reference(x, ylens, params, t_out):
    B, t_in, C = x.shape
    interp = jnp.asarray(_interp_matrix_np(t_in, t_out))
    w3, b3 = params["w3"], params["b3"]
    gamma, beta = params["gamma"], params["beta"]
    wf, bf = params["wf"], params["bf"]
    outs = []
    for b in range(B):
        h = interp @ x[b]
        for n in range(w3.shape[0]):
            hp = jnp.concatenate(
                [jnp.zeros((1, C), jnp.float32), h, jnp.zeros((1, C), jnp.float32)], 0)
            y = (hp[0:t_out] @ w3[n, 0] + hp[1:t_out + 1] @ w3[n, 1]
                 + hp[2:t_out + 2] @ w3[n, 2] + b3[n])
            m = jnp.mean(y)
            v = jnp.mean((y - m) ** 2)
            y = (y - m) / jnp.sqrt(v + 1e-5) * gamma[n] + beta[n]
            h = y * jnp.tanh(jax.nn.softplus(y))
        o = h @ wf + bf
        mask = (jnp.arange(t_out)[:, None] < ylens[b]).astype(o.dtype)
        outs.append(o * mask)
    return jnp.stack(outs)


if __name__ == "__main__":
    key = jax.random.PRNGKey(0)
    B, C, T_IN, OUT_C = 2, 32, 16, 32
    sampling_ratios = (1.0, 1.0)            # -> two (Conv1d, GroupNorm, Mish) blocks
    n_blocks = len(sampling_ratios)
    T_OUT_BUCKET = 24                       # static bucket >= ylens.max()

    ks = jax.random.split(key, 8)
    x = jax.random.normal(ks[0], (B, T_IN, C), jnp.float32)
    ylens = jnp.array([23, 18], jnp.int32)  # actual max length 23 < bucket 24

    s = 0.1
    params = dict(
        w3=s * jax.random.normal(ks[1], (n_blocks, 3, C, C), jnp.float32),
        b3=s * jax.random.normal(ks[2], (n_blocks, 1, C), jnp.float32),
        gamma=1.0 + s * jax.random.normal(ks[3], (n_blocks, 1, C), jnp.float32),
        beta=s * jax.random.normal(ks[4], (n_blocks, 1, C), jnp.float32),
        wf=s * jax.random.normal(ks[5], (C, OUT_C), jnp.float32),
        bf=s * jax.random.normal(ks[6], (1, OUT_C), jnp.float32),
    )

    run = jax.jit(lambda xx, yy: interpolate_regulator(xx, yy, params,
                                                       t_out_max=T_OUT_BUCKET))
    out, olens = run(x, ylens)
    out = jax.block_until_ready(out)

    t_act = int(np.asarray(ylens).max())
    ref = reference(x, ylens, params, t_out=t_act)
    out_np = np.asarray(out.astype(jnp.float32))
    # bf16 MXU matmuls (f32 accumulation) + bf16 output vs full-f32 reference.
    np.testing.assert_allclose(out_np[:, :t_act], np.asarray(ref), rtol=5e-2, atol=5e-2)
    assert np.all(out_np[:, t_act:] == 0.0)          # bucket-padded frames are zeroed
    assert out.shape == (B, T_OUT_BUCKET, OUT_C)
    print("KERNEL_OK")
</pallas_src>

<mosaic_0001>
module attributes {stable_mosaic.version = 11 : i64} {
  func.func @regulator_kernel(%arg0: i32, %arg1: memref<2xi32, #tpu.memory_space<smem>>, %arg2: memref<1xi32, #tpu.memory_space<smem>>, %arg3: memref<32x16xbf16, #tpu.memory_space<vmem>>, %arg4: memref<1x16x128xbf16, #tpu.memory_space<vmem>>, %arg5: memref<2x128x384xbf16, #tpu.memory_space<vmem>>, %arg6: memref<2x1x128xf32, #tpu.memory_space<vmem>>, %arg7: memref<2x1x128xf32, #tpu.memory_space<vmem>>, %arg8: memref<2x1x128xf32, #tpu.memory_space<vmem>>, %arg9: memref<128x128xbf16, #tpu.memory_space<vmem>>, %arg10: memref<1x128xf32, #tpu.memory_space<vmem>>, %arg11: memref<1x32x128xbf16, #tpu.memory_space<vmem>>) attributes {dimension_semantics = [#tpu.dimension_semantics<parallel>], iteration_bounds = array<i64: 2>, scalar_prefetch = 2 : i64, scratch_operands = 0 : i64, tpu.core_type = #tpu.core_type<tc>, window_params = [{pipeline_mode = #tpu.pipeline_mode<synchronous>, transform_indices = @transform_0, window_bounds = array<i64: 32, 16>}, {transform_indices = @transform_1, window_bounds = array<i64: 1, 16, 128>}, {pipeline_mode = #tpu.pipeline_mode<synchronous>, transform_indices = @transform_2, window_bounds = array<i64: 2, 128, 384>}, {pipeline_mode = #tpu.pipeline_mode<synchronous>, transform_indices = @transform_3, window_bounds = array<i64: 2, 1, 128>}, {pipeline_mode = #tpu.pipeline_mode<synchronous>, transform_indices = @transform_4, window_bounds = array<i64: 2, 1, 128>}, {pipeline_mode = #tpu.pipeline_mode<synchronous>, transform_indices = @transform_5, window_bounds = array<i64: 2, 1, 128>}, {pipeline_mode = #tpu.pipeline_mode<synchronous>, transform_indices = @transform_6, window_bounds = array<i64: 128, 128>}, {pipeline_mode = #tpu.pipeline_mode<synchronous>, transform_indices = @transform_7, window_bounds = array<i64: 1, 128>}, {transform_indices = @transform_8, window_bounds = array<i64: 1, 32, 128>}]} {
    %c0 = arith.constant 0 : index
    %0 = memref.load %arg2[%c0] : memref<1xi32, #tpu.memory_space<smem>>
    %1 = tpu.iota {dimensions = array<i32: 0>} : vector<32x1xi32>
    %2 = vector.broadcast %0 : i32 to vector<32x1xi32>
    %3 = arith.cmpi slt, %1, %2 : vector<32x1xi32>
    %4 = arith.extui %3 : vector<32x1xi1> to vector<32x1xi32>
    %5 = arith.sitofp %4 : vector<32x1xi32> to vector<32x1xf32>
    %c1_i32 = arith.constant 1 : i32
    %6 = vector.broadcast %c1_i32 : i32 to vector<32x1xi32>
    %7 = arith.cmpi sge, %1, %6 : vector<32x1xi32>
    %8 = arith.extui %7 : vector<32x1xi1> to vector<32x1xi32>
    %9 = arith.sitofp %8 : vector<32x1xi32> to vector<32x1xf32>
    %c31_i32 = arith.constant 31 : i32
    %10 = vector.broadcast %c31_i32 : i32 to vector<32x1xi32>
    %11 = arith.cmpi slt, %1, %10 : vector<32x1xi32>
    %12 = arith.extui %11 : vector<32x1xi1> to vector<32x1xi32>
    %13 = arith.sitofp %12 : vector<32x1xi32> to vector<32x1xf32>
    %c0_0 = arith.constant 0 : index
    %c0_1 = arith.constant 0 : index
    %14 = vector.load %arg3[%c0_0, %c0_1] : memref<32x16xbf16, #tpu.memory_space<vmem>>, vector<32x16xbf16>
    %c0_2 = arith.constant 0 : index
    %c0_3 = arith.constant 0 : index
    %c0_4 = arith.constant 0 : index
    %15 = vector.load %arg4[%c0_2, %c0_3, %c0_4] : memref<1x16x128xbf16, #tpu.memory_space<vmem>>, vector<1x16x128xbf16>
    %16 = vector.shape_cast %15 : vector<1x16x128xbf16> to vector<16x128xbf16>
    %cst = arith.constant dense<0.000000e+00> : vector<32x128xf32>
    %17 = tpu.matmul %14, %16, %cst {dimension_numbers = #tpu.dot_dimension_numbers<[1], [0], [0], [1], [0, 0, 1, 1], [], []>} : vector<32x16xbf16>, vector<16x128xbf16>, vector<32x128xf32> -> vector<32x128xf32>
    %18 = arith.sitofp %0 : i32 to f32
    %cst_5 = arith.constant 3.200000e+01 : f32
    %19 = arith.mulf %18, %cst_5 : f32
    %cst_6 = arith.constant 1.000000e+00 : f32
    %20 = arith.divf %cst_6, %19 : f32
    %21 = arith.truncf %17 : vector<32x128xf32> to vector<32x128xbf16>
    %c0_7 = arith.constant 0 : index
    %c0_8 = arith.constant 0 : index
    %c0_9 = arith.constant 0 : index
    %22 = vector.load %arg5[%c0_7, %c0_8, %c0_9] : memref<2x128x384xbf16, #tpu.memory_space<vmem>>, vector<1x128x384xbf16>
    %23 = vector.shape_cast %22 : vector<1x128x384xbf16> to vector<128x384xbf16>
    %cst_10 = arith.constant dense<0.000000e+00> : vector<32x384xf32>
    %24 = tpu.matmul %21, %23, %cst_10 {dimension_numbers = #tpu.dot_dimension_numbers<[1], [0], [0], [1], [0, 0, 1, 1], [], []>} : vector<32x128xbf16>, vector<128x384xbf16>, vector<32x384xf32> -> vector<32x384xf32>
    %25 = vector.extract_strided_slice %24 {offsets = [0, 0], sizes = [32, 128], strides = [1, 1]} : vector<32x384xf32> to vector<32x128xf32>
    %26 = vector.extract_strided_slice %24 {offsets = [0, 128], sizes = [32, 128], strides = [1, 1]} : vector<32x384xf32> to vector<32x128xf32>
    %27 = vector.extract_strided_slice %24 {offsets = [0, 256], sizes = [32, 128], strides = [1, 1]} : vector<32x384xf32> to vector<32x128xf32>
    %c0_11 = arith.constant 0 : index
    %c0_12 = arith.constant 0 : index
    %c0_13 = arith.constant 0 : index
    %28 = vector.load %arg6[%c0_11, %c0_12, %c0_13] : memref<2x1x128xf32, #tpu.memory_space<vmem>>, vector<1x1x128xf32>
    %29 = vector.shape_cast %28 : vector<1x1x128xf32> to vector<1x128xf32>
    %30 = vector.broadcast %29 : vector<1x128xf32> to vector<32x128xf32>
    %31 = arith.addf %26, %30 : vector<32x128xf32>
    %c1_i32_14 = arith.constant 1 : i32
    %32 = tpu.dynamic_rotate %25 by %c1_i32_14 dim 0 : vector<32x128xf32>, i32 -> vector<32x128xf32>
    %33 = vector.broadcast %9 : vector<32x1xf32> to vector<32x128xf32>
    %34 = arith.mulf %32, %33 : vector<32x128xf32>
    %35 = arith.addf %31, %34 : vector<32x128xf32>
    %c31_i32_15 = arith.constant 31 : i32
    %36 = tpu.dynamic_rotate %27 by %c31_i32_15 dim 0 : vector<32x128xf32>, i32 -> vector<32x128xf32>
    %37 = vector.broadcast %13 : vector<32x1xf32> to vector<32x128xf32>
    %38 = arith.mulf %36, %37 : vector<32x128xf32>
    %39 = arith.addf %35, %38 : vector<32x128xf32>
    %40 = vector.broadcast %5 : vector<32x1xf32> to vector<32x128xf32>
    %41 = arith.mulf %39, %40 : vector<32x128xf32>
    %cst_16 = arith.constant dense<0.000000e+00> : vector<128xf32>
    %42 = vector.multi_reduction <add>, %41, %cst_16 [0] : vector<32x128xf32> to vector<128xf32>
    %43 = vector.shape_cast %42 : vector<128xf32> to vector<1x128xf32>
    %44 = vector.shape_cast %43 : vector<1x128xf32> to vector<1x1x128xf32>
    %cst_17 = arith.constant dense<0.000000e+00> : vector<1xf32>
    %45 = vector.multi_reduction <add>, %44, %cst_17 [1, 2] : vector<1x1x128xf32> to vector<1xf32>
    %46 = vector.shape_cast %45 : vector<1xf32> to vector<1x1x1xf32>
    %47 = vector.extract %46[0, 0, 0] : f32 from vector<1x1x1xf32>
    %48 = arith.mulf %41, %41 : vector<32x128xf32>
    %cst_18 = arith.constant dense<0.000000e+00> : vector<128xf32>
    %49 = vector.multi_reduction <add>, %48, %cst_18 [0] : vector<32x128xf32> to vector<128xf32>
    %50 = vector.shape_cast %49 : vector<128xf32> to vector<1x128xf32>
    %51 = vector.shape_cast %50 : vector<1x128xf32> to vector<1x1x128xf32>
    %cst_19 = arith.constant dense<0.000000e+00> : vector<1xf32>
    %52 = vector.multi_reduction <add>, %51, %cst_19 [1, 2] : vector<1x1x128xf32> to vector<1xf32>
    %53 = vector.shape_cast %52 : vector<1xf32> to vector<1x1x1xf32>
    %54 = vector.extract %53[0, 0, 0] : f32 from vector<1x1x1xf32>
    %55 = arith.mulf %47, %20 : f32
    %56 = arith.mulf %54, %20 : f32
    %57 = arith.mulf %55, %55 : f32
    %58 = arith.subf %56, %57 : f32
    %cst_20 = arith.constant 0.000000e+00 : f32
    %59 = arith.maximumf %58, %cst_20 : f32
    %cst_21 = arith.constant 9.99999974E-6 : f32
    %60 = arith.addf %59, %cst_21 : f32
    %61 = math.rsqrt %60 : f32
    %c0_22 = arith.constant 0 : index
    %c0_23 = arith.constant 0 : index
    %c0_24 = arith.constant 0 : index
    %62 = vector.load %arg7[%c0_22, %c0_23, %c0_24] : memref<2x1x128xf32, #tpu.memory_space<vmem>>, vector<1x1x128xf32>
    %63 = vector.shape_cast %62 : vector<1x1x128xf32> to vector<1x128xf32>
    %64 = vector.broadcast %61 : f32 to vector<1x128xf32>
    %65 = arith.mulf %63, %64 : vector<1x128xf32>
    %c0_25 = arith.constant 0 : index
    %c0_26 = arith.constant 0 : index
    %c0_27 = arith.constant 0 : index
    %66 = vector.load %arg8[%c0_25, %c0_26, %c0_27] : memref<2x1x128xf32, #tpu.memory_space<vmem>>, vector<1x1x128xf32>
    %67 = vector.shape_cast %66 : vector<1x1x128xf32> to vector<1x128xf32>
    %68 = vector.broadcast %55 : f32 to vector<1x128xf32>
    %69 = arith.mulf %68, %65 : vector<1x128xf32>
    %70 = arith.subf %67, %69 : vector<1x128xf32>
    %71 = vector.broadcast %65 : vector<1x128xf32> to vector<32x128xf32>
    %72 = arith.mulf %39, %71 : vector<32x128xf32>
    %73 = vector.broadcast %70 : vector<1x128xf32> to vector<32x128xf32>
    %74 = arith.addf %72, %73 : vector<32x128xf32>
    %cst_28 = arith.constant -3.000000e+01 : f32
    %cst_29 = arith.constant 2.000000e+01 : f32
    %75 = vector.broadcast %cst_28 : f32 to vector<32x128xf32>
    %76 = arith.maximumf %75, %74 : vector<32x128xf32>
    %77 = vector.broadcast %cst_29 : f32 to vector<32x128xf32>
    %78 = arith.minimumf %77, %76 : vector<32x128xf32>
    %79 = math.exp %78 : vector<32x128xf32>
    %cst_30 = arith.constant 1.000000e+00 : f32
    %80 = vector.broadcast %cst_30 : f32 to vector<32x128xf32>
    %81 = arith.addf %80, %79 : vector<32x128xf32>
    %82 = arith.mulf %81, %81 : vector<32x128xf32>
    %cst_31 = arith.constant 1.000000e+00 : f32
    %83 = vector.broadcast %cst_31 : f32 to vector<32x128xf32>
    %84 = arith.subf %82, %83 : vector<32x128xf32>
    %85 = arith.mulf %74, %84 : vector<32x128xf32>
    %cst_32 = arith.constant 1.000000e+00 : f32
    %86 = vector.broadcast %cst_32 : f32 to vector<32x128xf32>
    %87 = arith.addf %82, %86 : vector<32x128xf32>
    %88 = tpu.reciprocal %87 {approx = true} : vector<32x128xf32> -> vector<32x128xf32>
    %89 = arith.mulf %85, %88 : vector<32x128xf32>
    %90 = vector.broadcast %5 : vector<32x1xf32> to vector<32x128xf32>
    %91 = arith.mulf %89, %90 : vector<32x128xf32>
    %92 = arith.truncf %91 : vector<32x128xf32> to vector<32x128xbf16>
    %c1 = arith.constant 1 : index
    %c0_33 = arith.constant 0 : index
    %c0_34 = arith.constant 0 : index
    %93 = vector.load %arg5[%c1, %c0_33, %c0_34] : memref<2x128x384xbf16, #tpu.memory_space<vmem>>, vector<1x128x384xbf16>
    %94 = vector.shape_cast %93 : vector<1x128x384xbf16> to vector<128x384xbf16>
    %cst_35 = arith.constant dense<0.000000e+00> : vector<32x384xf32>
    %95 = tpu.matmul %92, %94, %cst_35 {dimension_numbers = #tpu.dot_dimension_numbers<[1], [0], [0], [1], [0, 0, 1, 1], [], []>} : vector<32x128xbf16>, vector<128x384xbf16>, vector<32x384xf32> -> vector<32x384xf32>
    %96 = vector.extract_strided_slice %95 {offsets = [0, 0], sizes = [32, 128], strides = [1, 1]} : vector<32x384xf32> to vector<32x128xf32>
    %97 = vector.extract_strided_slice %95 {offsets = [0, 128], sizes = [32, 128], strides = [1, 1]} : vector<32x384xf32> to vector<32x128xf32>
    %98 = vector.extract_strided_slice %95 {offsets = [0, 256], sizes = [32, 128], strides = [1, 1]} : vector<32x384xf32> to vector<32x128xf32>
    %c1_36 = arith.constant 1 : index
    %c0_37 = arith.constant 0 : index
    %c0_38 = arith.constant 0 : index
    %99 = vector.load %arg6[%c1_36, %c0_37, %c0_38] : memref<2x1x128xf32, #tpu.memory_space<vmem>>, vector<1x1x128xf32>
    %100 = vector.shape_cast %99 : vector<1x1x128xf32> to vector<1x128xf32>
    %101 = vector.broadcast %100 : vector<1x128xf32> to vector<32x128xf32>
    %102 = arith.addf %97, %101 : vector<32x128xf32>
    %c1_i32_39 = arith.constant 1 : i32
    %103 = tpu.dynamic_rotate %96 by %c1_i32_39 dim 0 : vector<32x128xf32>, i32 -> vector<32x128xf32>
    %104 = vector.broadcast %9 : vector<32x1xf32> to vector<32x128xf32>
    %105 = arith.mulf %103, %104 : vector<32x128xf32>
    %106 = arith.addf %102, %105 : vector<32x128xf32>
    %c31_i32_40 = arith.constant 31 : i32
    %107 = tpu.dynamic_rotate %98 by %c31_i32_40 dim 0 : vector<32x128xf32>, i32 -> vector<32x128xf32>
    %108 = vector.broadcast %13 : vector<32x1xf32> to vector<32x128xf32>
    %109 = arith.mulf %107, %108 : vector<32x128xf32>
    %110 = arith.addf %106, %109 : vector<32x128xf32>
    %111 = vector.broadcast %5 : vector<32x1xf32> to vector<32x128xf32>
    %112 = arith.mulf %110, %111 : vector<32x128xf32>
    %cst_41 = arith.constant dense<0.000000e+00> : vector<128xf32>
    %113 = vector.multi_reduction <add>, %112, %cst_41 [0] : vector<32x128xf32> to vector<128xf32>
    %114 = vector.shape_cast %113 : vector<128xf32> to vector<1x128xf32>
    %115 = vector.shape_cast %114 : vector<1x128xf32> to vector<1x1x128xf32>
    %cst_42 = arith.constant dense<0.000000e+00> : vector<1xf32>
    %116 = vector.multi_reduction <add>, %115, %cst_42 [1, 2] : vector<1x1x128xf32> to vector<1xf32>
    %117 = vector.shape_cast %116 : vector<1xf32> to vector<1x1x1xf32>
    %118 = vector.extract %117[0, 0, 0] : f32 from vector<1x1x1xf32>
    %119 = arith.mulf %112, %112 : vector<32x128xf32>
    %cst_43 = arith.constant dense<0.000000e+00> : vector<128xf32>
    %120 = vector.multi_reduction <add>, %119, %cst_43 [0] : vector<32x128xf32> to vector<128xf32>
    %121 = vector.shape_cast %120 : vector<128xf32> to vector<1x128xf32>
    %122 = vector.shape_cast %121 : vector<1x128xf32> to vector<1x1x128xf32>
    %cst_44 = arith.constant dense<0.000000e+00> : vector<1xf32>
    %123 = vector.multi_reduction <add>, %122, %cst_44 [1, 2] : vector<1x1x128xf32> to vector<1xf32>
    %124 = vector.shape_cast %123 : vector<1xf32> to vector<1x1x1xf32>
    %125 = vector.extract %124[0, 0, 0] : f32 from vector<1x1x1xf32>
    %126 = arith.mulf %118, %20 : f32
    %127 = arith.mulf %125, %20 : f32
    %128 = arith.mulf %126, %126 : f32
    %129 = arith.subf %127, %128 : f32
    %cst_45 = arith.constant 0.000000e+00 : f32
    %130 = arith.maximumf %129, %cst_45 : f32
    %cst_46 = arith.constant 9.99999974E-6 : f32
    %131 = arith.addf %130, %cst_46 : f32
    %132 = math.rsqrt %131 : f32
    %c1_47 = arith.constant 1 : index
    %c0_48 = arith.constant 0 : index
    %c0_49 = arith.constant 0 : index
    %133 = vector.load %arg7[%c1_47, %c0_48, %c0_49] : memref<2x1x128xf32, #tpu.memory_space<vmem>>, vector<1x1x128xf32>
    %134 = vector.shape_cast %133 : vector<1x1x128xf32> to vector<1x128xf32>
    %135 = vector.broadcast %132 : f32 to vector<1x128xf32>
    %136 = arith.mulf %134, %135 : vector<1x128xf32>
    %c1_50 = arith.constant 1 : index
    %c0_51 = arith.constant 0 : index
    %c0_52 = arith.constant 0 : index
    %137 = vector.load %arg8[%c1_50, %c0_51, %c0_52] : memref<2x1x128xf32, #tpu.memory_space<vmem>>, vector<1x1x128xf32>
    %138 = vector.shape_cast %137 : vector<1x1x128xf32> to vector<1x128xf32>
    %139 = vector.broadcast %126 : f32 to vector<1x128xf32>
    %140 = arith.mulf %139, %136 : vector<1x128xf32>
    %141 = arith.subf %138, %140 : vector<1x128xf32>
    %142 = vector.broadcast %136 : vector<1x128xf32> to vector<32x128xf32>
    %143 = arith.mulf %110, %142 : vector<32x128xf32>
    %144 = vector.broadcast %141 : vector<1x128xf32> to vector<32x128xf32>
    %145 = arith.addf %143, %144 : vector<32x128xf32>
    %cst_53 = arith.constant -3.000000e+01 : f32
    %cst_54 = arith.constant 2.000000e+01 : f32
    %146 = vector.broadcast %cst_53 : f32 to vector<32x128xf32>
    %147 = arith.maximumf %146, %145 : vector<32x128xf32>
    %148 = vector.broadcast %cst_54 : f32 to vector<32x128xf32>
    %149 = arith.minimumf %148, %147 : vector<32x128xf32>
    %150 = math.exp %149 : vector<32x128xf32>
    %cst_55 = arith.constant 1.000000e+00 : f32
    %151 = vector.broadcast %cst_55 : f32 to vector<32x128xf32>
    %152 = arith.addf %151, %150 : vector<32x128xf32>
    %153 = arith.mulf %152, %152 : vector<32x128xf32>
    %cst_56 = arith.constant 1.000000e+00 : f32
    %154 = vector.broadcast %cst_56 : f32 to vector<32x128xf32>
    %155 = arith.subf %153, %154 : vector<32x128xf32>
    %156 = arith.mulf %145, %155 : vector<32x128xf32>
    %cst_57 = arith.constant 1.000000e+00 : f32
    %157 = vector.broadcast %cst_57 : f32 to vector<32x128xf32>
    %158 = arith.addf %153, %157 : vector<32x128xf32>
    %159 = tpu.reciprocal %158 {approx = true} : vector<32x128xf32> -> vector<32x128xf32>
    %160 = arith.mulf %156, %159 : vector<32x128xf32>
    %161 = vector.broadcast %5 : vector<32x1xf32> to vector<32x128xf32>
    %162 = arith.mulf %160, %161 : vector<32x128xf32>
    %163 = arith.truncf %162 : vector<32x128xf32> to vector<32x128xbf16>
    %c0_58 = arith.constant 0 : index
    %c0_59 = arith.constant 0 : index
    %164 = vector.load %arg9[%c0_58, %c0_59] : memref<128x128xbf16, #tpu.memory_space<vmem>>, vector<128x128xbf16>
    %cst_60 = arith.constant dense<0.000000e+00> : vector<32x128xf32>
    %165 = tpu.matmul %163, %164, %cst_60 {dimension_numbers = #tpu.dot_dimension_numbers<[1], [0], [0], [1], [0, 0, 1, 1], [], []>} : vector<32x128xbf16>, vector<128x128xbf16>, vector<32x128xf32> -> vector<32x128xf32>
    %c0_61 = arith.constant 0 : index
    %c0_62 = arith.constant 0 : index
    %166 = vector.load %arg10[%c0_61, %c0_62] : memref<1x128xf32, #tpu.memory_space<vmem>>, vector<1x128xf32>
    %167 = vector.broadcast %166 : vector<1x128xf32> to vector<32x128xf32>
    %168 = arith.addf %165, %167 : vector<32x128xf32>
    %169 = arith.index_cast %arg0 : i32 to index
    %170 = memref.load %arg1[%169] : memref<2xi32, #tpu.memory_space<smem>>
    %171 = vector.broadcast %170 : i32 to vector<32x1xi32>
    %172 = arith.cmpi slt, %1, %171 : vector<32x1xi32>
    %173 = arith.extui %172 : vector<32x1xi1> to vector<32x1xi32>
    %174 = arith.sitofp %173 : vector<32x1xi32> to vector<32x1xf32>
    %175 = vector.broadcast %174 : vector<32x1xf32> to vector<32x128xf32>
    %176 = arith.mulf %168, %175 : vector<32x128xf32>
    %177 = arith.truncf %176 : vector<32x128xf32> to vector<32x128xbf16>
    %c0_63 = arith.constant 0 : index
    %c0_64 = arith.constant 0 : index
    %c0_65 = arith.constant 0 : index
    %178 = vector.load %arg11[%c0_63, %c0_64, %c0_65] : memref<1x32x128xbf16, #tpu.memory_space<vmem>>, vector<1x32x128xbf16>
    %179 = vector.shape_cast %178 : vector<1x32x128xbf16> to vector<32x128xbf16>
    %180 = vector.shape_cast %177 : vector<32x128xbf16> to vector<1x32x128xbf16>
    tpu.vector_store %arg11[%c0_63, %c0_64, %c0_65], %180 {strides = array<i32>} : memref<1x32x128xbf16, #tpu.memory_space<vmem>>, vector<1x32x128xbf16>,
    return
  }
  func.func @transform_0(%arg0: i32, %arg1: memref<2xi32, #tpu.memory_space<smem>>, %arg2: memref<1xi32, #tpu.memory_space<smem>>) -> (i32, i32) {
    %c0_i32 = arith.constant 0 : i32
    %c0_i32_0 = arith.constant 0 : i32
    %c0_i32_1 = arith.constant 0 : i32
    return %c0_i32, %c0_i32_0 : i32, i32
  }
  func.func @transform_1(%arg0: i32, %arg1: memref<2xi32, #tpu.memory_space<smem>>, %arg2: memref<1xi32, #tpu.memory_space<smem>>) -> (i32, i32, i32) {
    %c0_i32 = arith.constant 0 : i32
    %c0_i32_0 = arith.constant 0 : i32
    %c0_i32_1 = arith.constant 0 : i32
    return %arg0, %c0_i32, %c0_i32_0 : i32, i32, i32
  }
  func.func @transform_2(%arg0: i32, %arg1: memref<2xi32, #tpu.memory_space<smem>>, %arg2: memref<1xi32, #tpu.memory_space<smem>>) -> (i32, i32, i32) {
    %c0_i32 = arith.constant 0 : i32
    %c0_i32_0 = arith.constant 0 : i32
    %c0_i32_1 = arith.constant 0 : i32
    %c0_i32_2 = arith.constant 0 : i32
    return %c0_i32, %c0_i32_0, %c0_i32_1 : i32, i32, i32
  }
  func.func @transform_3(%arg0: i32, %arg1: memref<2xi32, #tpu.memory_space<smem>>, %arg2: memref<1xi32, #tpu.memory_space<smem>>) -> (i32, i32, i32) {
    %c0_i32 = arith.constant 0 : i32
    %c0_i32_0 = arith.constant 0 : i32
    %c0_i32_1 = arith.constant 0 : i32
    %c0_i32_2 = arith.constant 0 : i32
    return %c0_i32, %c0_i32_0, %c0_i32_1 : i32, i32, i32
  }
  func.func @transform_4(%arg0: i32, %arg1: memref<2xi32, #tpu.memory_space<smem>>, %arg2: memref<1xi32, #tpu.memory_space<smem>>) -> (i32, i32, i32) {
    %c0_i32 = arith.constant 0 : i32
    %c0_i32_0 = arith.constant 0 : i32
    %c0_i32_1 = arith.constant 0 : i32
    %c0_i32_2 = arith.constant 0 : i32
    return %c0_i32, %c0_i32_0, %c0_i32_1 : i32, i32, i32
  }
  func.func @transform_5(%arg0: i32, %arg1: memref<2xi32, #tpu.memory_space<smem>>, %arg2: memref<1xi32, #tpu.memory_space<smem>>) -> (i32, i32, i32) {
    %c0_i32 = arith.constant 0 : i32
    %c0_i32_0 = arith.constant 0 : i32
    %c0_i32_1 = arith.constant 0 : i32
    %c0_i32_2 = arith.constant 0 : i32
    return %c0_i32, %c0_i32_0, %c0_i32_1 : i32, i32, i32
  }
  func.func @transform_6(%arg0: i32, %arg1: memref<2xi32, #tpu.memory_space<smem>>, %arg2: memref<1xi32, #tpu.memory_space<smem>>) -> (i32, i32) {
    %c0_i32 = arith.constant 0 : i32
    %c0_i32_0 = arith.constant 0 : i32
    %c0_i32_1 = arith.constant 0 : i32
    return %c0_i32, %c0_i32_0 : i32, i32
  }
  func.func @transform_7(%arg0: i32, %arg1: memref<2xi32, #tpu.memory_space<smem>>, %arg2: memref<1xi32, #tpu.memory_space<smem>>) -> (i32, i32) {
    %c0_i32 = arith.constant 0 : i32
    %c0_i32_0 = arith.constant 0 : i32
    %c0_i32_1 = arith.constant 0 : i32
    return %c0_i32, %c0_i32_0 : i32, i32
  }
  func.func @transform_8(%arg0: i32, %arg1: memref<2xi32, #tpu.memory_space<smem>>, %arg2: memref<1xi32, #tpu.memory_space<smem>>) -> (i32, i32, i32) {
    %c0_i32 = arith.constant 0 : i32
    %c0_i32_0 = arith.constant 0 : i32
    %c0_i32_1 = arith.constant 0 : i32
    return %arg0, %c0_i32, %c0_i32_0 : i32, i32, i32
  }
}

</mosaic_0001>

<llo_original>
// kernel: _lambda_.1
$region0: #{_lambda_.1}
  #allocation0 [shape = 'u32[]', space=smem, size = 0x4, offset = 0x4, fixed_abs, tag = 'smem constant byte address 0x4 - core index']
  #allocation1 [shape = 'u32[144,128]{1,0:T(1,128)}', space=vmem, size = 0x12000, scoped, tag = 'internal scratch']
  #allocation2 [shape = 's32[1]{0}', space=sflag, size = 0x4, scoped, tag = 'scoped memory for _lambda_.1']
  #allocation3 [shape = 'u8[512]{0}', space=smem, size = 0x200, scoped, tag = 'prefetched SMEM operand 0']
  #allocation4 [shape = 's32[1]{0:T(128)S(6)}', space=smem, size = 0x200, scoped, tag = 'prefetched SMEM operand 1']
  %s0 = inlined_call_operand.vmem [shape: s32[2], index: 0, kind: input, shape index: {}]
  %s1 = inlined_call_operand.<no memory space> [shape: s32[1], index: 1, kind: input, shape index: {}]
  %s2 = inlined_call_operand.vmem [shape: bf16[32,16], index: 2, kind: input, shape index: {}]
  %s3 = inlined_call_operand.vmem [shape: bf16[2,16,128], index: 3, kind: input, shape index: {}]
  %s4 = inlined_call_operand.vmem [shape: bf16[2,128,384], index: 4, kind: input, shape index: {}]
  %s5 = inlined_call_operand.vmem [shape: f32[2,1,128], index: 5, kind: input, shape index: {}]
  %s6 = inlined_call_operand.vmem [shape: f32[2,1,128], index: 6, kind: input, shape index: {}]
  %s7 = inlined_call_operand.vmem [shape: f32[2,1,128], index: 7, kind: input, shape index: {}]
  %s8 = inlined_call_operand.vmem [shape: bf16[128,128], index: 8, kind: input, shape index: {}]
  %s9 = inlined_call_operand.vmem [shape: f32[1,128], index: 9, kind: input, shape index: {}]
  %s10 = inlined_call_operand.vmem [shape: bf16[2,32,128], index: 10, kind: output, shape index: {}]
  %s11 = sld [smem:[#allocation0]]
  $region65: #{_lambda_.1} parent=0
    _
  %s13 = ssub.s32 1, %s11
  %s14 = scalar_select 0, %s13, %s11
  %s15 = sshll.u32 %s0, 4
  %s16 = int_to_ptr.vmem [resolvable:$true] %s15
  %18 = dma.vmem_to_smem %s16, 16, [#allocation3], [#allocation2]
  %19 = sst [smem:[#allocation4]] %s1
  %20 = dma.done [#allocation2], 16
  %21 = sfence
  loop: start=0, step=1, limit=4
  $region2: #{_lambda_.1} parent=0 // loop_pre_header
    _
  $region3: #{_lambda_.1} parent=0 // loop_header
    %s23 = sphi 0, %s27
    %p24 = scmp.ge.s32.totalorder %s23, 4
    %s31 = sphi 0, %s31
    %s33 = sphi 0, %s31
    %s34 = sphi 0, %s33
    %s48 = sphi 0, %s34
    %s54 = sphi 0, %s56
    %s57 = sphi 0, %s54
    %s58 = sphi 0, %s57
    %s74 = sphi 0, %s58
    %s78 = sphi 0, %s78
    %s80 = sphi 0, %s78
    %s81 = sphi 0, %s80
    %s95 = sphi 0, %s81
    %s99 = sphi 0, %s99
    %s101 = sphi 0, %s99
    %s102 = sphi 0, %s101
    %s116 = sphi 0, %s102
    %s120 = sphi 0, %s120
    %s122 = sphi 0, %s120
    %s123 = sphi 0, %s122
    %s137 = sphi 0, %s123
    %s141 = sphi 0, %s141
    %s143 = sphi 0, %s141
    %s144 = sphi 0, %s143
    %s158 = sphi 0, %s144
    %s162 = sphi 0, %s162
    %s164 = sphi 0, %s162
    %s165 = sphi 0, %s164
    %s179 = sphi 0, %s165
    %s183 = sphi 0, %s183
    %s185 = sphi 0, %s183
    %s186 = sphi 0, %s185
    %s200 = sphi 0, %s186
    %s206 = sphi 0, %s208
    %s209 = sphi 0, %s206
    %s210 = sphi 0, %s209
    %s226 = sphi 0, %s210
  $region4: #{_lambda_.1} parent=0 // loop_header_branch
    %26 = sbr.rel (%p24) target = $region8
  $region5: #{_lambda_.1} parent=0 // loop_body
    %s28 = ssub.s32 %s23, 1
    %s29 = ssub.s32 %s23, 2
    %s30 = sadd.s32 %s23, 1
    %s32 = sadd.s32 %s31, 1
    %p35 = scmp.eq.s32.totalorder %s23, 1
    %p36 = scmp.ne.s32.totalorder %s31, %s33
    %p37 = scmp.eq.s32.totalorder %s23, 0
    %p38 = por %p36, %p37
    %p39 = scmp.ne.s32.totalorder %s31, %s33
    %p40 = scmp.eq.s32.totalorder %s28, 1
    %p41 = por %p39, %p40
    %p42 = scmp.ne.s32.totalorder %s33, %s34
    %p43 = scmp.eq.s32.totalorder %s28, 0
    %p44 = por %p42, %p43
    %p45 = scmp.ne.s32.totalorder %s33, %s34
    %p46 = scmp.eq.s32.totalorder %s29, 1
    %p47 = por %p45, %p46
    %p49 = scmp.ne.s32.totalorder %s34, %s48
    %p50 = scmp.eq.s32.totalorder %s29, 0
    %p51 = por %p49, %p50
    %s52 = ssub.s32 %s23, %s30
    %p53 = scmp.eq.s32.totalorder %s52, 0
    %s55 = sadd.s32 %s54, 1
    %s56 = scalar_select %p53, %s54, %s55
    %p59 = pneg %p53
    %p60 = scmp.eq.s32.totalorder %s23, 1
    %p61 = por %p59, %p60
    %p62 = scmp.ne.s32.totalorder %s54, %s57
    %p63 = scmp.eq.s32.totalorder %s23, 0
    %p64 = por %p62, %p63
    %p65 = scmp.ne.s32.totalorder %s54, %s57
    %p66 = scmp.eq.s32.totalorder %s28, 1
    %p67 = por %p65, %p66
    %p68 = scmp.ne.s32.totalorder %s57, %s58
    %p69 = scmp.eq.s32.totalorder %s28, 0
    %p70 = por %p68, %p69
    %p71 = scmp.ne.s32.totalorder %s57, %s58
    %p72 = scmp.eq.s32.totalorder %s29, 1
    %p73 = por %p71, %p72
    %p75 = scmp.ne.s32.totalorder %s58, %s74
    %p76 = scmp.eq.s32.totalorder %s29, 0
    %p77 = por %p75, %p76
    %s79 = sadd.s32 %s78, 1
    %p82 = scmp.eq.s32.totalorder %s23, 1
    %p83 = scmp.ne.s32.totalorder %s78, %s80
    %p84 = scmp.eq.s32.totalorder %s23, 0
    %p85 = por %p83, %p84
    %p86 = scmp.ne.s32.totalorder %s78, %s80
    %p87 = scmp.eq.s32.totalorder %s28, 1
    %p88 = por %p86, %p87
    %p89 = scmp.ne.s32.totalorder %s80, %s81
    %p90 = scmp.eq.s32.totalorder %s28, 0
    %p91 = por %p89, %p90
    %p92 = scmp.ne.s32.totalorder %s80, %s81
    %p93 = scmp.eq.s32.totalorder %s29, 1
    %p94 = por %p92, %p93
    %p96 = scmp.ne.s32.totalorder %s81, %s95
    %p97 = scmp.eq.s32.totalorder %s29, 0
    %p98 = por %p96, %p97
    %s100 = sadd.s32 %s99, 1
    %p103 = scmp.eq.s32.totalorder %s23, 1
    %p104 = scmp.ne.s32.totalorder %s99, %s101
    %p105 = scmp.eq.s32.totalorder %s23, 0
    %p106 = por %p104, %p105
    %p107 = scmp.ne.s32.totalorder %s99, %s101
    %p108 = scmp.eq.s32.totalorder %s28, 1
    %p109 = por %p107, %p108
    %p110 = scmp.ne.s32.totalorder %s101, %s102
    %p111 = scmp.eq.s32.totalorder %s28, 0
    %p112 = por %p110, %p111
    %p113 = scmp.ne.s32.totalorder %s101, %s102
    %p114 = scmp.eq.s32.totalorder %s29, 1
    %p115 = por %p113, %p114
    %p117 = scmp.ne.s32.totalorder %s102, %s116
    %p118 = scmp.eq.s32.totalorder %s29, 0
    %p119 = por %p117, %p118
    %s121 = sadd.s32 %s120, 1
    %p124 = scmp.eq.s32.totalorder %s23, 1
    %p125 = scmp.ne.s32.totalorder %s120, %s122
    %p126 = scmp.eq.s32.totalorder %s23, 0
    %p127 = por %p125, %p126
    %p128 = scmp.ne.s32.totalorder %s120, %s122
    %p129 = scmp.eq.s32.totalorder %s28, 1
    %p130 = por %p128, %p129
    %p131 = scmp.ne.s32.totalorder %s122, %s123
    %p132 = scmp.eq.s32.totalorder %s28, 0
    %p133 = por %p131, %p132
    %p134 = scmp.ne.s32.totalorder %s122, %s123
    %p135 = scmp.eq.s32.totalorder %s29, 1
    %p136 = por %p134, %p135
    %p138 = scmp.ne.s32.totalorder %s123, %s137
    %p139 = scmp.eq.s32.totalorder %s29, 0
    %p140 = por %p138, %p139
    %s142 = sadd.s32 %s141, 1
    %p145 = scmp.eq.s32.totalorder %s23, 1
    %p146 = scmp.ne.s32.totalorder %s141, %s143
    %p147 = scmp.eq.s32.totalorder %s23, 0
    %p148 = por %p146, %p147
    %p149 = scmp.ne.s32.totalorder %s141, %s143
    %p150 = scmp.eq.s32.totalorder %s28, 1
    %p151 = por %p149, %p150
    %p152 = scmp.ne.s32.totalorder %s143, %s144
    %p153 = scmp.eq.s32.totalorder %s28, 0
    %p154 = por %p152, %p153
    %p155 = scmp.ne.s32.totalorder %s143, %s144
    %p156 = scmp.eq.s32.totalorder %s29, 1
    %p157 = por %p155, %p156
    %p159 = scmp.ne.s32.totalorder %s144, %s158
    %p160 = scmp.eq.s32.totalorder %s29, 0
    %p161 = por %p159, %p160
    %s163 = sadd.s32 %s162, 1
    %p166 = scmp.eq.s32.totalorder %s23, 1
    %p167 = scmp.ne.s32.totalorder %s162, %s164
    %p168 = scmp.eq.s32.totalorder %s23, 0
    %p169 = por %p167, %p168
    %p170 = scmp.ne.s32.totalorder %s162, %s164
    %p171 = scmp.eq.s32.totalorder %s28, 1
    %p172 = por %p170, %p171
    %p173 = scmp.ne.s32.totalorder %s164, %s165
    %p174 = scmp.eq.s32.totalorder %s28, 0
    %p175 = por %p173, %p174
    %p176 = scmp.ne.s32.totalorder %s164, %s165
    %p177 = scmp.eq.s32.totalorder %s29, 1
    %p178 = por %p176, %p177
    %p180 = scmp.ne.s32.totalorder %s165, %s179
    %p181 = scmp.eq.s32.totalorder %s29, 0
    %p182 = por %p180, %p181
    %s184 = sadd.s32 %s183, 1
    %p187 = scmp.eq.s32.totalorder %s23, 1
    %p188 = scmp.ne.s32.totalorder %s183, %s185
    %p189 = scmp.eq.s32.totalorder %s23, 0
    %p190 = por %p188, %p189
    %p191 = scmp.ne.s32.totalorder %s183, %s185
    %p192 = scmp.eq.s32.totalorder %s28, 1
    %p193 = por %p191, %p192
    %p194 = scmp.ne.s32.totalorder %s185, %s186
    %p195 = scmp.eq.s32.totalorder %s28, 0
    %p196 = por %p194, %p195
    %p197 = scmp.ne.s32.totalorder %s185, %s186
    %p198 = scmp.eq.s32.totalorder %s29, 1
    %p199 = por %p197, %p198
    %p201 = scmp.ne.s32.totalorder %s186, %s200
    %p202 = scmp.eq.s32.totalorder %s29, 0
    %p203 = por %p201, %p202
    %s204 = ssub.s32 %s23, %s30
    %p205 = scmp.eq.s32.totalorder %s204, 0
    %s207 = sadd.s32 %s206, 1
    %s208 = scalar_select %p205, %s206, %s207
    %p211 = pneg %p205
    %p212 = scmp.eq.s32.totalorder %s23, 1
    %p213 = por %p211, %p212
    %p214 = scmp.ne.s32.totalorder %s206, %s209
    %p215 = scmp.eq.s32.totalorder %s23, 0
    %p216 = por %p214, %p215
    %p217 = scmp.ne.s32.totalorder %s206, %s209
    %p218 = scmp.eq.s32.totalorder %s28, 1
    %p219 = por %p217, %p218
    %p220 = scmp.ne.s32.totalorder %s209, %s210
    %p221 = scmp.eq.s32.totalorder %s28, 0
    %p222 = por %p220, %p221
    %p223 = scmp.ne.s32.totalorder %s209, %s210
    %p224 = scmp.eq.s32.totalorder %s29, 1
    %p225 = por %p223, %p224
    %p227 = scmp.ne.s32.totalorder %s210, %s226
    %p228 = scmp.eq.s32.totalorder %s29, 0
    %p229 = por %p227, %p228
    %p230 = scmp.le.s32.totalorder 1, %s23
    %p231 = scmp.lt.s32.totalorder %s23, 3
    %p232 = pnand %p230, %p231
    %p233 = pneg %p232
    // Predicated region
    $region9: #{_lambda_.1} parent=5 // pred_check
      _
    $region10: #{_lambda_.1} parent=5 // pred_check_branch
      %235 = sbr.rel (%p232) target = $region12
    $region11: #{_lambda_.1} parent=5 // pred_region
      %s236 = ssub.s32 %s23, 1
      // Predicated region
      $region13: #{_lambda_.1} parent=11 // pred_check
        %p237 = pneg %p44
      $region14: #{_lambda_.1} parent=11 // pred_check_branch
        %239 = sbr.rel (%p237) target = $region16
      $region15: #{_lambda_.1} parent=11 // pred_region
        _
      $region16: #{_lambda_.1} parent=11 // pred_fallthru
        _
      // Predicated region
      $region17: #{_lambda_.1} parent=11 // pred_check
        %p240 = pneg %p91
      $region18: #{_lambda_.1} parent=11 // pred_check_branch
        %242 = sbr.rel (%p240) target = $region20
      $region19: #{_lambda_.1} parent=11 // pred_region
        _
      $region20: #{_lambda_.1} parent=11 // pred_fallthru
        _
      // Predicated region
      $region21: #{_lambda_.1} parent=11 // pred_check
        %p243 = pneg %p112
      $region22: #{_lambda_.1} parent=11 // pred_check_branch
        %245 = sbr.rel (%p243) target = $region24
      $region23: #{_lambda_.1} parent=11 // pred_region
        _
      $region24: #{_lambda_.1} parent=11 // pred_fallthru
        _
      // Predicated region
      $region25: #{_lambda_.1} parent=11 // pred_check
        %p246 = pneg %p133
      $region26: #{_lambda_.1} parent=11 // pred_check_branch
        %248 = sbr.rel (%p246) target = $region28
      $region27: #{_lambda_.1} parent=11 // pred_region
        _
      $region28: #{_lambda_.1} parent=11 // pred_fallthru
        _
      // Predicated region
      $region29: #{_lambda_.1} parent=11 // pred_check
        %p249 = pneg %p154
      $region30: #{_lambda_.1} parent=11 // pred_check_branch
        %251 = sbr.rel (%p249) target = $region32
      $region31: #{_lambda_.1} parent=11 // pred_region
        _
      $region32: #{_lambda_.1} parent=11 // pred_fallthru
        _
      // Predicated region
      $region33: #{_lambda_.1} parent=11 // pred_check
        %p252 = pneg %p175
      $region34: #{_lambda_.1} parent=11 // pred_check_branch
        %254 = sbr.rel (%p252) target = $region36
      $region35: #{_lambda_.1} parent=11 // pred_region
        _
      $region36: #{_lambda_.1} parent=11 // pred_fallthru
        _
      // Predicated region
      $region37: #{_lambda_.1} parent=11 // pred_check
        %p255 = pneg %p196
      $region38: #{_lambda_.1} parent=11 // pred_check_branch
        %257 = sbr.rel (%p255) target = $region40
      $region39: #{_lambda_.1} parent=11 // pred_region
        _
      $region40: #{_lambda_.1} parent=11 // pred_fallthru
        _
    $region12: #{_lambda_.1} parent=5 // pred_fallthru
      _
    %p258 = scmp.lt.s32.totalorder %s23, 2
    // Predicated region
    $region41: #{_lambda_.1} parent=5 // pred_check
      %p259 = pneg %p258
    $region42: #{_lambda_.1} parent=5 // pred_check_branch
      %261 = sbr.rel (%p259) target = $region44
    $region43: #{_lambda_.1} parent=5 // pred_region
      // Predicated region
      $region45: #{_lambda_.1} parent=43 // pred_check
        %p262 = pneg %p64
      $region46: #{_lambda_.1} parent=43 // pred_check_branch
        %264 = sbr.rel (%p262) target = $region48
      $region47: #{_lambda_.1} parent=43 // pred_region
        %p265 = scmp.lt.s32.totalorder %s23, 1
        %s266 = scalar_select %p265, %s23, 1
        %s267 = smul.addr %s266, 2
        %s268 = smul.addr %s267, 4
        %s269 = scalar_lea.vmem %s3, %s268
      $region48: #{_lambda_.1} parent=43 // pred_fallthru
        _
    $region44: #{_lambda_.1} parent=5 // pred_fallthru
      _
    %p270 = scmp.le.s32.totalorder 1, %s23
    %p271 = scmp.lt.s32.totalorder %s23, 3
    %p272 = pnand %p270, %p271
    %p273 = pneg %p272
    // Predicated region
    $region49: #{_lambda_.1} parent=5 // pred_check
      _
    $region50: #{_lambda_.1} parent=5 // pred_check_branch
      %275 = sbr.rel (%p272) target = $region52
    $region51: #{_lambda_.1} parent=5 // pred_region
      %s276 = ssub.s32 %s23, 1
      %p277 = pneg %p44
      %p278 = pneg %p41
      %p279 = scmp.lt.s32.totalorder %s28, 1
      %s280 = scalar_select %p279, %s28, 1
      %s281 = smul.addr %s280, 2
      %s282 = smul.addr %s281, 4
      %s283 = scalar_lea.vmem %s3, %s282
      %p284 = pneg %p70
      %p285 = pneg %p67
      %p286 = pneg %p91
      %p287 = pneg %p88
      %p288 = pneg %p112
      %p289 = pneg %p109
      %p290 = pneg %p133
      %p291 = pneg %p130
      %p292 = pneg %p154
      %p293 = pneg %p151
      %p294 = pneg %p175
      %p295 = pneg %p172
      %p296 = pneg %p196
      %p297 = pneg %p193
      %p298 = pneg %p222
      %p299 = pneg %p219
      %p300 = scmp.lt.s32.totalorder %s28, 1
      %s301 = scalar_select %p300, %s28, 1
      %s302 = smul.addr %s301, 4
      %s303 = smul.addr %s302, 4
      %s304 = scalar_lea.vmem %s10, %s303
      %p305 = scmp.lt.s32.totalorder %s28, 1
      %s306 = scalar_select %p305, %s28, 1
      %s307 = smul.addr %s306, 2
      %s308 = smul.addr %s307, 4
      %s309 = scalar_lea.vmem %s3, %s308
      %p310 = scmp.lt.s32.totalorder %s28, 1
      %s311 = scalar_select %p310, %s28, 1
      %s312 = smul.addr %s311, 4
      %s313 = smul.addr %s312, 4
      %s314 = scalar_lea.vmem %s10, %s313
      %s316 = sld [smem:[#allocation4]]
      %v317 = vlaneseq
      %v318 = vshrl.u32 %v317, 7
      %v319 = vadd.s32 %v318, 8
      %v320 = vadd.s32 %v318, 16
      %v321 = vadd.s32 %v318, 24
      %v322 = vstv %s316
      %vm323 = vcmp.lt.s32.totalorder %v318, %v322
      %vm324 = vcmp.lt.s32.totalorder %v319, %v322
      %vm325 = vcmp.lt.s32.totalorder %v320, %v322
      %vm326 = vcmp.lt.s32.totalorder %v321, %v322
      %v327 = vsel %vm323, 1, 0
      %v328 = vsel %vm324, 1, 0
      %v329 = vsel %vm325, 1, 0
      %v330 = vsel %vm326, 1, 0
      %v331 = vcvt.s32.f32 %v327
      %v332 = vcvt.s32.f32 %v328
      %v333 = vcvt.s32.f32 %v329
      %v334 = vcvt.s32.f32 %v330
      %vm335 = vcmp.ge.s32.totalorder %v318, 1
      %vm336 = vcmp.ge.s32.totalorder %v319, 1
      %vm337 = vcmp.ge.s32.totalorder %v320, 1
      %vm338 = vcmp.ge.s32.totalorder %v321, 1
      %v339 = vsel %vm335, 1, 0
      %v340 = vsel %vm336, 1, 0
      %v341 = vsel %vm337, 1, 0
      %v342 = vsel %vm338, 1, 0
      %v343 = vcvt.s32.f32 %v339
      %v344 = vcvt.s32.f32 %v340
      %v345 = vcvt.s32.f32 %v341
      %v346 = vcvt.s32.f32 %v342
      %vm347 = vcmp.lt.s32.totalorder %v318, 31
      %vm348 = vcmp.lt.s32.totalorder %v319, 31
      %vm349 = vcmp.lt.s32.totalorder %v320, 31
      %vm350 = vcmp.lt.s32.totalorder %v321, 31
      %v351 = vsel %vm347, 1, 0
      %v352 = vsel %vm348, 1, 0
      %v353 = vsel %vm349, 1, 0
      %v354 = vsel %vm350, 1, 0
      %v355 = vcvt.s32.f32 %v351
      %v356 = vcvt.s32.f32 %v352
      %v357 = vcvt.s32.f32 %v353
      %v358 = vcvt.s32.f32 %v354
      %v359 = vld [vmem:[%s2] sm:$0xf]
      %v360 = vld [vmem:[%s2 + $0x4] sm:$0xf]
      %v361 = vld [vmem:[%s2 + $0x8] sm:$0xf]
      %v362 = vld [vmem:[%s2 + $0xc] sm:$0xf]
      %v363 = vld [vmem:[%s309] sm:$0xf]
      %v364 = vld [vmem:[%s309 + $0x4] sm:$0xf]
      %v369 = vunpack.c.l.b16 %v359
      %v370 = vunpack.c.l.b16 %v360
      %v371 = vunpack.c.l.b16 %v361
      %v372 = vunpack.c.l.b16 %v362
      %v373 = vpack.c.b16 %v370, %v369
      %v374 = vpack.c.b16 %v372, %v371
      %v377 = vunpack.c.l.b16 %v363
      %v378 = vunpack.c.l.b16 %v364
      %v379 = vpack.c.b16 %v378, %v377
      %vm381 = vcmask 130048
      %v383 = vsel %vm381, %v373, 0
      %v386 = vsel %vm381, %v374, 0
      %388 = vmatprep.subr.bf16.mxu0 0
      %389 = vmatpush1.bf16.msra.mxu0 %v379
      %390 = vmatprep.subr.bf16.mxu0 0
      %391 = vmatpush1.bf16.msra.mxu0 0
      %392 = vmatprep.subr.bf16.mxu0 0
      %393 = vmatpush1.bf16.msra.mxu0 0
      %394 = vmatprep.subr.bf16.mxu0 0
      %395 = vmatpush1.bf16.msra.mxu0 0
      %396 = vmatprep.subr.bf16.mxu0 0
      %397 = vmatpush1.bf16.msra.mxu0 0
      %398 = vmatprep.subr.bf16.mxu0 0
      %399 = vmatpush1.bf16.msra.mxu0 0
      %400 = vmatprep.subr.bf16.mxu0 0
      %401 = vmatpush1.bf16.msra.mxu0 0
      %402 = vmatprep.subr.bf16.mxu0 0
      %403 = vmatpush1.bf16.msra.mxu0 0
      %404 = vmatprep.subr.bf16.mxu0 0
      %405 = vmatpush1.bf16.msra.mxu0 0
      %406 = vmatprep.subr.bf16.mxu0 0
      %407 = vmatpush1.bf16.msra.mxu0 0
      %408 = vmatprep.subr.bf16.mxu0 0
      %409 = vmatpush1.bf16.msra.mxu0 0
      %410 = vmatprep.subr.bf16.mxu0 0
      %411 = vmatpush1.bf16.msra.mxu0 0
      %412 = vmatprep.subr.bf16.mxu0 0
      %413 = vmatpush1.bf16.msra.mxu0 0
      %414 = vmatprep.subr.bf16.mxu0 0
      %415 = vmatpush1.bf16.msra.mxu0 0
      %416 = vmatprep.subr.bf16.mxu0 0
      %417 = vmatpush1.bf16.msra.mxu0 0
      %418 = vmatprep.subr.bf16.mxu0 0
      %419 = vmatpush1.bf16.msra.mxu0 0
      %420 = vmatprep.mubr.bf16.mxu0 0
      %421 = vmatmul.mubr.bf16.gmra.mrb[0].mxu0 %v383
      %v422 = vpop.f32.mrb[0].mxu0
      %v423 = vadd.f32 0.0, %v422
      %v424 = vpop.f32.mrb[0].mxu0
      %v425 = vpop.f32.mrb[0].mxu0
      %v426 = vadd.f32 0.0, %v425
      %v427 = vpop.f32.mrb[0].mxu0
      %428 = vmatprep.mubr.bf16.mxu0 0
      %429 = vmatmul.mubr.bf16.gmra.mrb[0].mxu0 %v386
      %v430 = vpop.f32.mrb[0].mxu0
      %v431 = vadd.f32 0.0, %v430
      %v432 = vpop.f32.mrb[0].mxu0
      %v433 = vpop.f32.mrb[0].mxu0
      %v434 = vadd.f32 0.0, %v433
      %v435 = vpop.f32.mrb[0].mxu0
      %436 = vdwg.mxu0
      %s437 = scvt.s32.f32 %s316
      %s438 = smul.f32 %s437, 32.0
      %v439 = vstv %s438
      %v440 = vrcp.pop %v439
      %s441 = vtos %v440
      %v442 = vpack.c.bf16 %v426, %v423
      %v443 = vpack.c.bf16 %v434, %v431
      %v444 = vld [vmem:[%s4] sm:$0xff]
      %v445 = vld [vmem:[%s4 + $0x8] sm:$0xf]
      %v446 = vld [vmem:[%s4 + $0xc] sm:$0xff]
      %v447 = vld [vmem:[%s4 + $0x14] sm:$0xf]
      %v448 = vld [vmem:[%s4 + $0x18] sm:$0xff]
      %v449 = vld [vmem:[%s4 + $0x20] sm:$0xf]
      %v450 = vld [vmem:[%s4 + $0x24] sm:$0xff]
      %v451 = vld [vmem:[%s4 + $0x2c] sm:$0xf]
      %v452 = vld [vmem:[%s4 + $0x30] sm:$0xff]
      %v453 = vld [vmem:[%s4 + $0x38] sm:$0xf]
      %v454 = vld [vmem:[%s4 + $0x3c] sm:$0xff]
      %v455 = vld [vmem:[%s4 + $0x44] sm:$0xf]
      %v456 = vld [vmem:[%s4 + $0x48] sm:$0xff]
      %v457 = vld [vmem:[%s4 + $0x50] sm:$0xf]
      %v458 = vld [vmem:[%s4 + $0x54] sm:$0xff]
      %v459 = vld [vmem:[%s4 + $0x5c] sm:$0xf]
      %v460 = vld [vmem:[%s4 + $0x60] sm:$0xff]
      %v461 = vld [vmem:[%s4 + $0x68] sm:$0xf]
      %v462 = vld [vmem:[%s4 + $0x6c] sm:$0xff]
      %v463 = vld [vmem:[%s4 + $0x74] sm:$0xf]
      %v464 = vld [vmem:[%s4 + $0x78] sm:$0xff]
      %v465 = vld [vmem:[%s4 + $0x80] sm:$0xf]
      %v466 = vld [vmem:[%s4 + $0x84] sm:$0xff]
      %v467 = vld [vmem:[%s4 + $0x8c] sm:$0xf]
      %v468 = vld [vmem:[%s4 + $0x90] sm:$0xff]
      %v469 = vld [vmem:[%s4 + $0x98] sm:$0xf]
      %v470 = vld [vmem:[%s4 + $0x9c] sm:$0xff]
      %v471 = vld [vmem:[%s4 + $0xa4] sm:$0xf]
      %v472 = vld [vmem:[%s4 + $0xa8] sm:$0xff]
      %v473 = vld [vmem:[%s4 + $0xb0] sm:$0xf]
      %v474 = vld [vmem:[%s4 + $0xb4] sm:$0xff]
      %v475 = vld [vmem:[%s4 + $0xbc] sm:$0xf]
      %v508 = vunpack.c.l.b16 %v444
      %v509 = vunpack.c.h.b16 %v444
      %v510 = vunpack.c.l.b16 %v445
      %v511 = vunpack.c.l.b16 %v446
      %v512 = vunpack.c.h.b16 %v446
      %v513 = vunpack.c.l.b16 %v447
      %v514 = vunpack.c.l.b16 %v448
      %v515 = vunpack.c.h.b16 %v448
      %v516 = vunpack.c.l.b16 %v449
      %v517 = vunpack.c.l.b16 %v450
      %v518 = vunpack.c.h.b16 %v450
      %v519 = vunpack.c.l.b16 %v451
      %v520 = vunpack.c.l.b16 %v452
      %v521 = vunpack.c.h.b16 %v452
      %v522 = vunpack.c.l.b16 %v453
      %v523 = vunpack.c.l.b16 %v454
      %v524 = vunpack.c.h.b16 %v454
      %v525 = vunpack.c.l.b16 %v455
      %v526 = vunpack.c.l.b16 %v456
      %v527 = vunpack.c.h.b16 %v456
      %v528 = vunpack.c.l.b16 %v457
      %v529 = vunpack.c.l.b16 %v458
      %v530 = vunpack.c.h.b16 %v458
      %v531 = vunpack.c.l.b16 %v459
      %v532 = vunpack.c.l.b16 %v460
      %v533 = vunpack.c.h.b16 %v460
      %v534 = vunpack.c.l.b16 %v461
      %v535 = vunpack.c.l.b16 %v462
      %v536 = vunpack.c.h.b16 %v462
      %v537 = vunpack.c.l.b16 %v463
      %v538 = vunpack.c.l.b16 %v464
      %v539 = vunpack.c.h.b16 %v464
      %v540 = vunpack.c.l.b16 %v465
      %v541 = vunpack.c.l.b16 %v466
      %v542 = vunpack.c.h.b16 %v466
      %v543 = vunpack.c.l.b16 %v467
      %v544 = vunpack.c.l.b16 %v468
      %v545 = vunpack.c.h.b16 %v468
      %v546 = vunpack.c.l.b16 %v469
      %v547 = vunpack.c.l.b16 %v470
      %v548 = vunpack.c.h.b16 %v470
      %v549 = vunpack.c.l.b16 %v471
      %v550 = vunpack.c.l.b16 %v472
      %v551 = vunpack.c.h.b16 %v472
      %v552 = vunpack.c.l.b16 %v473
      %v553 = vunpack.c.l.b16 %v474
      %v554 = vunpack.c.h.b16 %v474
      %v555 = vunpack.c.l.b16 %v475
      %v556 = vpack.c.b16 %v511, %v508
      %v557 = vpack.c.b16 %v512, %v509
      %v558 = vpack.c.b16 %v513, %v510
      %v559 = vpack.c.b16 %v517, %v514
      %v560 = vpack.c.b16 %v518, %v515
      %v561 = vpack.c.b16 %v519, %v516
      %v562 = vpack.c.b16 %v523, %v520
      %v563 = vpack.c.b16 %v524, %v521
      %v564 = vpack.c.b16 %v525, %v522
      %v565 = vpack.c.b16 %v529, %v526
      %v566 = vpack.c.b16 %v530, %v527
      %v567 = vpack.c.b16 %v531, %v528
      %v568 = vpack.c.b16 %v535, %v532
      %v569 = vpack.c.b16 %v536, %v533
      %v570 = vpack.c.b16 %v537, %v534
      %v571 = vpack.c.b16 %v541, %v538
      %v572 = vpack.c.b16 %v542, %v539
      %v573 = vpack.c.b16 %v543, %v540
      %v574 = vpack.c.b16 %v547, %v544
      %v575 = vpack.c.b16 %v548, %v545
      %v576 = vpack.c.b16 %v549, %v546
      %v577 = vpack.c.b16 %v553, %v550
      %v578 = vpack.c.b16 %v554, %v551
      %v579 = vpack.c.b16 %v555, %v552
      %604 = vmatprep.subr.bf16.mxu0 %v557
      %605 = vmatpush1.bf16.msra.mxu0 %v556
      %606 = vmatprep.subr.bf16.mxu0 %v560
      %607 = vmatpush1.bf16.msra.mxu0 %v559
      %608 = vmatprep.subr.bf16.mxu0 %v563
      %609 = vmatpush1.bf16.msra.mxu0 %v562
      %610 = vmatprep.subr.bf16.mxu0 %v566
      %611 = vmatpush1.bf16.msra.mxu0 %v565
      %612 = vmatprep.subr.bf16.mxu0 %v569
      %613 = vmatpush1.bf16.msra.mxu0 %v568
      %614 = vmatprep.subr.bf16.mxu0 %v572
      %615 = vmatpush1.bf16.msra.mxu0 %v571
      %616 = vmatprep.subr.bf16.mxu0 %v575
      %617 = vmatpush1.bf16.msra.mxu0 %v574
      %618 = vmatprep.subr.bf16.mxu0 %v578
      %619 = vmatpush1.bf16.msra.mxu0 %v577
      %620 = vmatprep.subr.bf16.mxu0 0
      %621 = vmatpush1.bf16.msra.mxu0 0
      %622 = vmatprep.subr.bf16.mxu0 0
      %623 = vmatpush1.bf16.msra.mxu0 0
      %624 = vmatprep.subr.bf16.mxu0 0
      %625 = vmatpush1.bf16.msra.mxu0 0
      %626 = vmatprep.subr.bf16.mxu0 0
      %627 = vmatpush1.bf16.msra.mxu0 0
      %628 = vmatprep.subr.bf16.mxu0 0
      %629 = vmatpush1.bf16.msra.mxu0 0
      %630 = vmatprep.subr.bf16.mxu0 0
      %631 = vmatpush1.bf16.msra.mxu0 0
      %632 = vmatprep.subr.bf16.mxu0 0
      %633 = vmatpush1.bf16.msra.mxu0 0
      %634 = vmatprep.subr.bf16.mxu0 0
      %635 = vmatpush1.bf16.msra.mxu0 0
      %636 = vmatprep.mubr.bf16.mxu0 0
      %637 = vmatmul.mubr.bf16.gmra.mrb[0].mxu0 %v442
      %v638 = vpop.f32.mrb[0].mxu0
      %v639 = vadd.f32 0.0, %v638
      %v640 = vpop.f32.mrb[0].mxu0
      %v641 = vadd.f32 0.0, %v640
      %v642 = vpop.f32.mrb[0].mxu0
      %v643 = vadd.f32 0.0, %v642
      %v644 = vpop.f32.mrb[0].mxu0
      %v645 = vadd.f32 0.0, %v644
      %646 = vmatprep.mubr.bf16.mxu0 0
      %647 = vmatmul.mubr.bf16.gmra.mrb[0].mxu0 %v443
      %v648 = vpop.f32.mrb[0].mxu0
      %v649 = vadd.f32 0.0, %v648
      %v650 = vpop.f32.mrb[0].mxu0
      %v651 = vadd.f32 0.0, %v650
      %v652 = vpop.f32.mrb[0].mxu0
      %v653 = vadd.f32 0.0, %v652
      %v654 = vpop.f32.mrb[0].mxu0
      %v655 = vadd.f32 0.0, %v654
      %656 = vdwg.mxu0
      %657 = vmatprep.subr.bf16.mxu0 0
      %658 = vmatpush1.bf16.msra.mxu0 %v558
      %659 = vmatprep.subr.bf16.mxu0 0
      %660 = vmatpush1.bf16.msra.mxu0 %v561
      %661 = vmatprep.subr.bf16.mxu0 0
      %662 = vmatpush1.bf16.msra.mxu0 %v564
      %663 = vmatprep.subr.bf16.mxu0 0
      %664 = vmatpush1.bf16.msra.mxu0 %v567
      %665 = vmatprep.subr.bf16.mxu0 0
      %666 = vmatpush1.bf16.msra.mxu0 %v570
      %667 = vmatprep.subr.bf16.mxu0 0
      %668 = vmatpush1.bf16.msra.mxu0 %v573
      %669 = vmatprep.subr.bf16.mxu0 0
      %670 = vmatpush1.bf16.msra.mxu0 %v576
      %671 = vmatprep.subr.bf16.mxu0 0
      %672 = vmatpush1.bf16.msra.mxu0 %v579
      %673 = vmatprep.subr.bf16.mxu0 0
      %674 = vmatpush1.bf16.msra.mxu0 0
      %675 = vmatprep.subr.bf16.mxu0 0
      %676 = vmatpush1.bf16.msra.mxu0 0
      %677 = vmatprep.subr.bf16.mxu0 0
      %678 = vmatpush1.bf16.msra.mxu0 0
      %679 = vmatprep.subr.bf16.mxu0 0
      %680 = vmatpush1.bf16.msra.mxu0 0
      %681 = vmatprep.subr.bf16.mxu0 0
      %682 = vmatpush1.bf16.msra.mxu0 0
      %683 = vmatprep.subr.bf16.mxu0 0
      %684 = vmatpush1.bf16.msra.mxu0 0
      %685 = vmatprep.subr.bf16.mxu0 0
      %686 = vmatpush1.bf16.msra.mxu0 0
      %687 = vmatprep.subr.bf16.mxu0 0
      %688 = vmatpush1.bf16.msra.mxu0 0
      %689 = vmatprep.mubr.bf16.mxu0 0
      %690 = vmatmul.mubr.bf16.gmra.mrb[0].mxu0 %v442
      %v691 = vpop.f32.mrb[0].mxu0
      %v692 = vadd.f32 0.0, %v691
      %v693 = vpop.f32.mrb[0].mxu0
      %v694 = vpop.f32.mrb[0].mxu0
      %v695 = vadd.f32 0.0, %v694
      %v696 = vpop.f32.mrb[0].mxu0
      %697 = vmatprep.mubr.bf16.mxu0 0
      %698 = vmatmul.mubr.bf16.gmra.mrb[0].mxu0 %v443
      %v699 = vpop.f32.mrb[0].mxu0
      %v700 = vadd.f32 0.0, %v699
      %v701 = vpop.f32.mrb[0].mxu0
      %v702 = vpop.f32.mrb[0].mxu0
      %v703 = vadd.f32 0.0, %v702
      %v704 = vpop.f32.mrb[0].mxu0
      %705 = vdwg.mxu0
      %v706 = vld [vmem:[%s5] sm:$0x1]
      %v708 = vlaneseq
      %v709 = vshrl.u32 %v708, 7
      %v710 = vsub.s32 0, %v709
      %v711 = vrot.slane %v706, %v710
      %v713 = vadd.f32 %v641, %v711
      %v714 = vadd.f32 %v645, %v711
      %v715 = vadd.f32 %v651, %v711
      %v716 = vadd.f32 %v655, %v711
      %v717 = vrot.slane %v639, 7
      %v718 = vrot.slane %v643, 7
      %v719 = vrot.slane %v649, 7
      %v720 = vrot.slane %v653, 7
      %vm721 = vcmp.lt.s32.totalorder %v318, 1
      %v722 = vsel %vm721, %v719, %v720
      %v723 = vsel %vm721, %v718, %v719
      %v724 = vsel %vm721, %v717, %v718
      %v725 = vsel %vm721, %v720, %v717
      %v726 = vmul.f32 %v725, %v343
      %v727 = vmul.f32 %v724, %v344
      %v728 = vmul.f32 %v723, %v345
      %v729 = vmul.f32 %v722, %v346
      %v730 = vadd.f32 %v713, %v726
      %v731 = vadd.f32 %v714, %v727
      %v732 = vadd.f32 %v715, %v728
      %v733 = vadd.f32 %v716, %v729
      %v734 = vrot.slane %v692, 1
      %v735 = vrot.slane %v695, 1
      %v736 = vrot.slane %v700, 1
      %v737 = vrot.slane %v703, 1
      %vm738 = vcmp.lt.s32.totalorder %v318, 7
      %v739 = vsel %vm738, %v736, %v737
      %v740 = vsel %vm738, %v735, %v736
      %v741 = vsel %vm738, %v734, %v735
      %v742 = vsel %vm738, %v737, %v734
      %v743 = vmul.f32 %v741, %v355
      %v744 = vmul.f32 %v740, %v356
      %v745 = vmul.f32 %v739, %v357
      %v746 = vmul.f32 %v742, %v358
      %v747 = vadd.f32 %v730, %v743
      %v748 = vadd.f32 %v731, %v744
      %v749 = vadd.f32 %v732, %v745
      %v750 = vadd.f32 %v733, %v746
      %v751 = vmul.f32 %v747, %v331
      %v752 = vmul.f32 %v748, %v332
      %v753 = vmul.f32 %v749, %v333
      %v754 = vmul.f32 %v750, %v334
      %v755 = vadd.f32 %v751, %v752
      %v756 = vadd.f32 %v755, %v753
      %v757 = vadd.f32 %v756, %v754
      %v758 = vrot.slane %v757, 4
      %v759 = vadd.f32 %v757, %v758
      %v760 = vrot.slane %v759, 2
      %v761 = vadd.f32 %v759, %v760
      %v762 = vrot.slane %v761, 1
      %v763 = vadd.f32 %v761, %v762
      %vm764 = vcmask 1040384
      %v765 = vsel %vm764, %v763, 0.0
      %766 = vadd.xlane.f32.xlu0 %v765
      %v767 = vpop.xlane.xlu0 %766
      %v768 = vrot.slane %v767, 4
      %v769 = vadd.f32 %v767, %v768
      %v770 = vrot.slane %v769, 2
      %v771 = vadd.f32 %v769, %v770
      %v772 = vrot.slane %v771, 1
      %v773 = vadd.f32 %v771, %v772
      %s774 = vtos %v773
      %v775 = vmul.f32 %v751, %v751
      %v776 = vmul.f32 %v752, %v752
      %v777 = vmul.f32 %v753, %v753
      %v778 = vmul.f32 %v754, %v754
      %v779 = vadd.f32 %v775, %v776
      %v780 = vadd.f32 %v779, %v777
      %v781 = vadd.f32 %v780, %v778
      %v782 = vrot.slane %v781, 4
      %v783 = vadd.f32 %v781, %v782
      %v784 = vrot.slane %v783, 2
      %v785 = vadd.f32 %v783, %v784
      %v786 = vrot.slane %v785, 1
      %v787 = vadd.f32 %v785, %v786
      %v788 = vsel %vm764, %v787, 0.0
      %789 = vadd.xlane.f32.xlu0 %v788
      %v790 = vpop.xlane.xlu0 %789
      %v791 = vrot.slane %v790, 4
      %v792 = vadd.f32 %v790, %v791
      %v793 = vrot.slane %v792, 2
      %v794 = vadd.f32 %v792, %v793
      %v795 = vrot.slane %v794, 1
      %v796 = vadd.f32 %v794, %v795
      %s797 = vtos %v796
      %s798 = smul.f32 %s774, %s441
      %s799 = smul.f32 %s797, %s441
      %s800 = smul.f32 %s798, %s798
      %s801 = ssub.f32 %s799, %s800
      %s802 = smax.f32 %s801, 0.0
      %s803 = sadd.f32 %s802, 1e-05
      %v804 = vstv %s803
      %v805 = vrsqrt.pop %v804
      %s806 = vtos %v805
      %v807 = vld [vmem:[%s6] sm:$0x1]
      %v808 = vstv %s806
      %v809 = vmul.f32 %v807, %v808
      %v810 = vld [vmem:[%s7] sm:$0x1]
      %v811 = vstv %s798
      %v812 = vmul.f32 %v811, %v809
      %v813 = vsub.f32 %v810, %v812
      %v815 = vlaneseq
      %v816 = vshrl.u32 %v815, 7
      %v817 = vsub.s32 0, %v816
      %v818 = vrot.slane %v809, %v817
      %v820 = vmul.f32 %v747, %v818
      %v821 = vmul.f32 %v748, %v818
      %v822 = vmul.f32 %v749, %v818
      %v823 = vmul.f32 %v750, %v818
      %v825 = vlaneseq
      %v826 = vshrl.u32 %v825, 7
      %v827 = vsub.s32 0, %v826
      %v828 = vrot.slane %v813, %v827
      %v830 = vadd.f32 %v820, %v828
      %v831 = vadd.f32 %v821, %v828
      %v832 = vadd.f32 %v822, %v828
      %v833 = vadd.f32 %v823, %v828
      %v834 = vmax.f32 %v830, -30.0
      %v835 = vmax.f32 %v831, -30.0
      %v836 = vmax.f32 %v832, -30.0
      %v837 = vmax.f32 %v833, -30.0
      %v838 = vmin.f32 %v834, 20.0
      %v839 = vmin.f32 %v835, 20.0
      %v840 = vmin.f32 %v836, 20.0
      %v841 = vmin.f32 %v837, 20.0
      %v842 = vmul.f32 %v838, 1.442695
      %v843 = vpow.pop %v842
      %v844 = vmul.f32 %v839, 1.442695
      %v845 = vpow.pop %v844
      %v846 = vmul.f32 %v840, 1.442695
      %v847 = vpow.pop %v846
      %v848 = vmul.f32 %v841, 1.442695
      %v849 = vpow.pop %v848
      %v850 = vadd.f32 %v843, 1.0
      %v851 = vadd.f32 %v845, 1.0
      %v852 = vadd.f32 %v847, 1.0
      %v853 = vadd.f32 %v849, 1.0
      %v854 = vmul.f32 %v850, %v850
      %v855 = vmul.f32 %v851, %v851
      %v856 = vmul.f32 %v852, %v852
      %v857 = vmul.f32 %v853, %v853
      %v858 = vsub.f32 %v854, 1.0
      %v859 = vsub.f32 %v855, 1.0
      %v860 = vsub.f32 %v856, 1.0
      %v861 = vsub.f32 %v857, 1.0
      %v862 = vmul.f32 %v830, %v858
      %v863 = vmul.f32 %v831, %v859
      %v864 = vmul.f32 %v832, %v860
      %v865 = vmul.f32 %v833, %v861
      %v866 = vadd.f32 %v854, 1.0
      %v867 = vadd.f32 %v855, 1.0
      %v868 = vadd.f32 %v856, 1.0
      %v869 = vadd.f32 %v857, 1.0
      %v870 = vrcp.pop %v866
      %v871 = vrcp.pop %v867
      %v872 = vrcp.pop %v868
      %v873 = vrcp.pop %v869
      %v874 = vmul.f32 %v862, %v870
      %v875 = vmul.f32 %v863, %v871
      %v876 = vmul.f32 %v864, %v872
      %v877 = vmul.f32 %v865, %v873
      %v878 = vmul.f32 %v874, %v331
      %v879 = vmul.f32 %v875, %v332
      %v880 = vmul.f32 %v876, %v333
      %v881 = vmul.f32 %v877, %v334
      %v882 = vpack.c.bf16 %v879, %v878
      %v883 = vpack.c.bf16 %v881, %v880
      %s884 = scalar_lea.vmem %s4, 192
      %v885 = vld [vmem:[%s884] sm:$0xff]
      %v886 = vld [vmem:[%s884 + $0x8] sm:$0xf]
      %v887 = vld [vmem:[%s884 + $0xc] sm:$0xff]
      %v888 = vld [vmem:[%s884 + $0x14] sm:$0xf]
      %v889 = vld [vmem:[%s884 + $0x18] sm:$0xff]
      %v890 = vld [vmem:[%s884 + $0x20] sm:$0xf]
      %v891 = vld [vmem:[%s884 + $0x24] sm:$0xff]
      %v892 = vld [vmem:[%s884 + $0x2c] sm:$0xf]
      %v893 = vld [vmem:[%s884 + $0x30] sm:$0xff]
      %v894 = vld [vmem:[%s884 + $0x38] sm:$0xf]
      %v895 = vld [vmem:[%s884 + $0x3c] sm:$0xff]
      %v896 = vld [vmem:[%s884 + $0x44] sm:$0xf]
      %v897 = vld [vmem:[%s884 + $0x48] sm:$0xff]
      %v898 = vld [vmem:[%s884 + $0x50] sm:$0xf]
      %v899 = vld [vmem:[%s884 + $0x54] sm:$0xff]
      %v900 = vld [vmem:[%s884 + $0x5c] sm:$0xf]
      %v901 = vld [vmem:[%s884 + $0x60] sm:$0xff]
      %v902 = vld [vmem:[%s884 + $0x68] sm:$0xf]
      %v903 = vld [vmem:[%s884 + $0x6c] sm:$0xff]
      %v904 = vld [vmem:[%s884 + $0x74] sm:$0xf]
      %v905 = vld [vmem:[%s884 + $0x78] sm:$0xff]
      %v906 = vld [vmem:[%s884 + $0x80] sm:$0xf]
      %v907 = vld [vmem:[%s884 + $0x84] sm:$0xff]
      %v908 = vld [vmem:[%s884 + $0x8c] sm:$0xf]
      %v909 = vld [vmem:[%s884 + $0x90] sm:$0xff]
      %v910 = vld [vmem:[%s884 + $0x98] sm:$0xf]
      %v911 = vld [vmem:[%s884 + $0x9c] sm:$0xff]
      %v912 = vld [vmem:[%s884 + $0xa4] sm:$0xf]
      %v913 = vld [vmem:[%s884 + $0xa8] sm:$0xff]
      %v914 = vld [vmem:[%s884 + $0xb0] sm:$0xf]
      %v915 = vld [vmem:[%s884 + $0xb4] sm:$0xff]
      %v916 = vld [vmem:[%s884 + $0xbc] sm:$0xf]
      %v949 = vunpack.c.l.b16 %v885
      %v950 = vunpack.c.h.b16 %v885
      %v951 = vunpack.c.l.b16 %v886
      %v952 = vunpack.c.l.b16 %v887
      %v953 = vunpack.c.h.b16 %v887
      %v954 = vunpack.c.l.b16 %v888
      %v955 = vunpack.c.l.b16 %v889
      %v956 = vunpack.c.h.b16 %v889
      %v957 = vunpack.c.l.b16 %v890
      %v958 = vunpack.c.l.b16 %v891
      %v959 = vunpack.c.h.b16 %v891
      %v960 = vunpack.c.l.b16 %v892
      %v961 = vunpack.c.l.b16 %v893
      %v962 = vunpack.c.h.b16 %v893
      %v963 = vunpack.c.l.b16 %v894
      %v964 = vunpack.c.l.b16 %v895
      %v965 = vunpack.c.h.b16 %v895
      %v966 = vunpack.c.l.b16 %v896
      %v967 = vunpack.c.l.b16 %v897
      %v968 = vunpack.c.h.b16 %v897
      %v969 = vunpack.c.l.b16 %v898
      %v970 = vunpack.c.l.b16 %v899
      %v971 = vunpack.c.h.b16 %v899
      %v972 = vunpack.c.l.b16 %v900
      %v973 = vunpack.c.l.b16 %v901
      %v974 = vunpack.c.h.b16 %v901
      %v975 = vunpack.c.l.b16 %v902
      %v976 = vunpack.c.l.b16 %v903
      %v977 = vunpack.c.h.b16 %v903
      %v978 = vunpack.c.l.b16 %v904
      %v979 = vunpack.c.l.b16 %v905
      %v980 = vunpack.c.h.b16 %v905
      %v981 = vunpack.c.l.b16 %v906
      %v982 = vunpack.c.l.b16 %v907
      %v983 = vunpack.c.h.b16 %v907
      %v984 = vunpack.c.l.b16 %v908
      %v985 = vunpack.c.l.b16 %v909
      %v986 = vunpack.c.h.b16 %v909
      %v987 = vunpack.c.l.b16 %v910
      %v988 = vunpack.c.l.b16 %v911
      %v989 = vunpack.c.h.b16 %v911
      %v990 = vunpack.c.l.b16 %v912
      %v991 = vunpack.c.l.b16 %v913
      %v992 = vunpack.c.h.b16 %v913
      %v993 = vunpack.c.l.b16 %v914
      %v994 = vunpack.c.l.b16 %v915
      %v995 = vunpack.c.h.b16 %v915
      %v996 = vunpack.c.l.b16 %v916
      %v997 = vpack.c.b16 %v952, %v949
      %v998 = vpack.c.b16 %v953, %v950
      %v999 = vpack.c.b16 %v954, %v951
      %v1000 = vpack.c.b16 %v958, %v955
      %v1001 = vpack.c.b16 %v959, %v956
      %v1002 = vpack.c.b16 %v960, %v957
      %v1003 = vpack.c.b16 %v964, %v961
      %v1004 = vpack.c.b16 %v965, %v962
      %v1005 = vpack.c.b16 %v966, %v963
      %v1006 = vpack.c.b16 %v970, %v967
      %v1007 = vpack.c.b16 %v971, %v968
      %v1008 = vpack.c.b16 %v972, %v969
      %v1009 = vpack.c.b16 %v976, %v973
      %v1010 = vpack.c.b16 %v977, %v974
      %v1011 = vpack.c.b16 %v978, %v975
      %v1012 = vpack.c.b16 %v982, %v979
      %v1013 = vpack.c.b16 %v983, %v980
      %v1014 = vpack.c.b16 %v984, %v981
      %v1015 = vpack.c.b16 %v988, %v985
      %v1016 = vpack.c.b16 %v989, %v986
      %v1017 = vpack.c.b16 %v990, %v987
      %v1018 = vpack.c.b16 %v994, %v991
      %v1019 = vpack.c.b16 %v995, %v992
      %v1020 = vpack.c.b16 %v996, %v993
      %1045 = vmatprep.subr.bf16.mxu0 %v998
      %1046 = vmatpush1.bf16.msra.mxu0 %v997
      %1047 = vmatprep.subr.bf16.mxu0 %v1001
      %1048 = vmatpush1.bf16.msra.mxu0 %v1000
      %1049 = vmatprep.subr.bf16.mxu0 %v1004
      %1050 = vmatpush1.bf16.msra.mxu0 %v1003
      %1051 = vmatprep.subr.bf16.mxu0 %v1007
      %1052 = vmatpush1.bf16.msra.mxu0 %v1006
      %1053 = vmatprep.subr.bf16.mxu0 %v1010
      %1054 = vmatpush1.bf16.msra.mxu0 %v1009
      %1055 = vmatprep.subr.bf16.mxu0 %v1013
      %1056 = vmatpush1.bf16.msra.mxu0 %v1012
      %1057 = vmatprep.subr.bf16.mxu0 %v1016
      %1058 = vmatpush1.bf16.msra.mxu0 %v1015
      %1059 = vmatprep.subr.bf16.mxu0 %v1019
      %1060 = vmatpush1.bf16.msra.mxu0 %v1018
      %1061 = vmatprep.subr.bf16.mxu0 0
      %1062 = vmatpush1.bf16.msra.mxu0 0
      %1063 = vmatprep.subr.bf16.mxu0 0
      %1064 = vmatpush1.bf16.msra.mxu0 0
      %1065 = vmatprep.subr.bf16.mxu0 0
      %1066 = vmatpush1.bf16.msra.mxu0 0
      %1067 = vmatprep.subr.bf16.mxu0 0
      %1068 = vmatpush1.bf16.msra.mxu0 0
      %1069 = vmatprep.subr.bf16.mxu0 0
      %1070 = vmatpush1.bf16.msra.mxu0 0
      %1071 = vmatprep.subr.bf16.mxu0 0
      %1072 = vmatpush1.bf16.msra.mxu0 0
      %1073 = vmatprep.subr.bf16.mxu0 0
      %1074 = vmatpush1.bf16.msra.mxu0 0
      %1075 = vmatprep.subr.bf16.mxu0 0
      %1076 = vmatpush1.bf16.msra.mxu0 0
      %1077 = vmatprep.mubr.bf16.mxu0 0
      %1078 = vmatmul.mubr.bf16.gmra.mrb[0].mxu0 %v882
      %v1079 = vpop.f32.mrb[0].mxu0
      %v1080 = vadd.f32 0.0, %v1079
      %v1081 = vpop.f32.mrb[0].mxu0
      %v1082 = vadd.f32 0.0, %v1081
      %v1083 = vpop.f32.mrb[0].mxu0
      %v1084 = vadd.f32 0.0, %v1083
      %v1085 = vpop.f32.mrb[0].mxu0
      %v1086 = vadd.f32 0.0, %v1085
      %1087 = vmatprep.mubr.bf16.mxu0 0
      %1088 = vmatmul.mubr.bf16.gmra.mrb[0].mxu0 %v883
      %v1089 = vpop.f32.mrb[0].mxu0
      %v1090 = vadd.f32 0.0, %v1089
      %v1091 = vpop.f32.mrb[0].mxu0
      %v1092 = vadd.f32 0.0, %v1091
      %v1093 = vpop.f32.mrb[0].mxu0
      %v1094 = vadd.f32 0.0, %v1093
      %v1095 = vpop.f32.mrb[0].mxu0
      %v1096 = vadd.f32 0.0, %v1095
      %1097 = vdwg.mxu0
      %1098 = vmatprep.subr.bf16.mxu0 0
      %1099 = vmatpush1.bf16.msra.mxu0 %v999
      %1100 = vmatprep.subr.bf16.mxu0 0
      %1101 = vmatpush1.bf16.msra.mxu0 %v1002
      %1102 = vmatprep.subr.bf16.mxu0 0
      %1103 = vmatpush1.bf16.msra.mxu0 %v1005
      %1104 = vmatprep.subr.bf16.mxu0 0
      %1105 = vmatpush1.bf16.msra.mxu0 %v1008
      %1106 = vmatprep.subr.bf16.mxu0 0
      %1107 = vmatpush1.bf16.msra.mxu0 %v1011
      %1108 = vmatprep.subr.bf16.mxu0 0
      %1109 = vmatpush1.bf16.msra.mxu0 %v1014
      %1110 = vmatprep.subr.bf16.mxu0 0
      %1111 = vmatpush1.bf16.msra.mxu0 %v1017
      %1112 = vmatprep.subr.bf16.mxu0 0
      %1113 = vmatpush1.bf16.msra.mxu0 %v1020
      %1114 = vmatprep.subr.bf16.mxu0 0
      %1115 = vmatpush1.bf16.msra.mxu0 0
      %1116 = vmatprep.subr.bf16.mxu0 0
      %1117 = vmatpush1.bf16.msra.mxu0 0
      %1118 = vmatprep.subr.bf16.mxu0 0
      %1119 = vmatpush1.bf16.msra.mxu0 0
      %1120 = vmatprep.subr.bf16.mxu0 0
      %1121 = vmatpush1.bf16.msra.mxu0 0
      %1122 = vmatprep.subr.bf16.mxu0 0
      %1123 = vmatpush1.bf16.msra.mxu0 0
      %1124 = vmatprep.subr.bf16.mxu0 0
      %1125 = vmatpush1.bf16.msra.mxu0 0
      %1126 = vmatprep.subr.bf16.mxu0 0
      %1127 = vmatpush1.bf16.msra.mxu0 0
      %1128 = vmatprep.subr.bf16.mxu0 0
      %1129 = vmatpush1.bf16.msra.mxu0 0
      %1130 = vmatprep.mubr.bf16.mxu0 0
      %1131 = vmatmul.mubr.bf16.gmra.mrb[0].mxu0 %v882
      %v1132 = vpop.f32.mrb[0].mxu0
      %v1133 = vadd.f32 0.0, %v1132
      %v1134 = vpop.f32.mrb[0].mxu0
      %v1135 = vpop.f32.mrb[0].mxu0
      %v1136 = vadd.f32 0.0, %v1135
      %v1137 = vpop.f32.mrb[0].mxu0
      %1138 = vmatprep.mubr.bf16.mxu0 0
      %1139 = vmatmul.mubr.bf16.gmra.mrb[0].mxu0 %v883
      %v1140 = vpop.f32.mrb[0].mxu0
      %v1141 = vadd.f32 0.0, %v1140
      %v1142 = vpop.f32.mrb[0].mxu0
      %v1143 = vpop.f32.mrb[0].mxu0
      %v1144 = vadd.f32 0.0, %v1143
      %v1145 = vpop.f32.mrb[0].mxu0
      %1146 = vdwg.mxu0
      %s1147 = scalar_lea.vmem %s5, 1
      %v1148 = vld [vmem:[%s1147] sm:$0x1]
      %v1150 = vlaneseq
      %v1151 = vshrl.u32 %v1150, 7
      %v1152 = vsub.s32 0, %v1151
      %v1153 = vrot.slane %v1148, %v1152
      %v1155 = vadd.f32 %v1082, %v1153
      %v1156 = vadd.f32 %v1086, %v1153
      %v1157 = vadd.f32 %v1092, %v1153
      %v1158 = vadd.f32 %v1096, %v1153
      %v1159 = vrot.slane %v1080, 7
      %v1160 = vrot.slane %v1084, 7
      %v1161 = vrot.slane %v1090, 7
      %v1162 = vrot.slane %v1094, 7
      %v1163 = vsel %vm721, %v1161, %v1162
      %v1164 = vsel %vm721, %v1160, %v1161
      %v1165 = vsel %vm721, %v1159, %v1160
      %v1166 = vsel %vm721, %v1162, %v1159
      %v1167 = vmul.f32 %v1166, %v343
      %v1168 = vmul.f32 %v1165, %v344
      %v1169 = vmul.f32 %v1164, %v345
      %v1170 = vmul.f32 %v1163, %v346
      %v1171 = vadd.f32 %v1155, %v1167
      %v1172 = vadd.f32 %v1156, %v1168
      %v1173 = vadd.f32 %v1157, %v1169
      %v1174 = vadd.f32 %v1158, %v1170
      %v1175 = vrot.slane %v1133, 1
      %v1176 = vrot.slane %v1136, 1
      %v1177 = vrot.slane %v1141, 1
      %v1178 = vrot.slane %v1144, 1
      %v1179 = vsel %vm738, %v1177, %v1178
      %v1180 = vsel %vm738, %v1176, %v1177
      %v1181 = vsel %vm738, %v1175, %v1176
      %v1182 = vsel %vm738, %v1178, %v1175
      %v1183 = vmul.f32 %v1181, %v355
      %v1184 = vmul.f32 %v1180, %v356
      %v1185 = vmul.f32 %v1179, %v357
      %v1186 = vmul.f32 %v1182, %v358
      %v1187 = vadd.f32 %v1171, %v1183
      %v1188 = vadd.f32 %v1172, %v1184
      %v1189 = vadd.f32 %v1173, %v1185
      %v1190 = vadd.f32 %v1174, %v1186
      %v1191 = vmul.f32 %v1187, %v331
      %v1192 = vmul.f32 %v1188, %v332
      %v1193 = vmul.f32 %v1189, %v333
      %v1194 = vmul.f32 %v1190, %v334
      %v1195 = vadd.f32 %v1191, %v1192
      %v1196 = vadd.f32 %v1195, %v1193
      %v1197 = vadd.f32 %v1196, %v1194
      %v1198 = vrot.slane %v1197, 4
      %v1199 = vadd.f32 %v1197, %v1198
      %v1200 = vrot.slane %v1199, 2
      %v1201 = vadd.f32 %v1199, %v1200
      %v1202 = vrot.slane %v1201, 1
      %v1203 = vadd.f32 %v1201, %v1202
      %v1204 = vsel %vm764, %v1203, 0.0
      %1205 = vadd.xlane.f32.xlu0 %v1204
      %v1206 = vpop.xlane.xlu0 %1205
      %v1207 = vrot.slane %v1206, 4
      %v1208 = vadd.f32 %v1206, %v1207
      %v1209 = vrot.slane %v1208, 2
      %v1210 = vadd.f32 %v1208, %v1209
      %v1211 = vrot.slane %v1210, 1
      %v1212 = vadd.f32 %v1210, %v1211
      %s1213 = vtos %v1212
      %v1214 = vmul.f32 %v1191, %v1191
      %v1215 = vmul.f32 %v1192, %v1192
      %v1216 = vmul.f32 %v1193, %v1193
      %v1217 = vmul.f32 %v1194, %v1194
      %v1218 = vadd.f32 %v1214, %v1215
      %v1219 = vadd.f32 %v1218, %v1216
      %v1220 = vadd.f32 %v1219, %v1217
      %v1221 = vrot.slane %v1220, 4
      %v1222 = vadd.f32 %v1220, %v1221
      %v1223 = vrot.slane %v1222, 2
      %v1224 = vadd.f32 %v1222, %v1223
      %v1225 = vrot.slane %v1224, 1
      %v1226 = vadd.f32 %v1224, %v1225
      %v1227 = vsel %vm764, %v1226, 0.0
      %1228 = vadd.xlane.f32.xlu0 %v1227
      %v1229 = vpop.xlane.xlu0 %1228
      %v1230 = vrot.slane %v1229, 4
      %v1231 = vadd.f32 %v1229, %v1230
      %v1232 = vrot.slane %v1231, 2
      %v1233 = vadd.f32 %v1231, %v1232
      %v1234 = vrot.slane %v1233, 1
      %v1235 = vadd.f32 %v1233, %v1234
      %s1236 = vtos %v1235
      %s1237 = smul.f32 %s1213, %s441
      %s1238 = smul.f32 %s1236, %s441
      %s1239 = smul.f32 %s1237, %s1237
      %s1240 = ssub.f32 %s1238, %s1239
      %s1241 = smax.f32 %s1240, 0.0
      %s1242 = sadd.f32 %s1241, 1e-05
      %v1243 = vstv %s1242
      %v1244 = vrsqrt.pop %v1243
      %s1245 = vtos %v1244
      %s1246 = scalar_lea.vmem %s6, 1
      %v1247 = vld [vmem:[%s1246] sm:$0x1]
      %v1248 = vstv %s1245
      %v1249 = vmul.f32 %v1247, %v1248
      %s1250 = scalar_lea.vmem %s7, 1
      %v1251 = vld [vmem:[%s1250] sm:$0x1]
      %v1252 = vstv %s1237
      %v1253 = vmul.f32 %v1252, %v1249
      %v1254 = vsub.f32 %v1251, %v1253
      %v1256 = vlaneseq
      %v1257 = vshrl.u32 %v1256, 7
      %v1258 = vsub.s32 0, %v1257
      %v1259 = vrot.slane %v1249, %v1258
      %v1261 = vmul.f32 %v1187, %v1259
      %v1262 = vmul.f32 %v1188, %v1259
      %v1263 = vmul.f32 %v1189, %v1259
      %v1264 = vmul.f32 %v1190, %v1259
      %v1266 = vlaneseq
      %v1267 = vshrl.u32 %v1266, 7
      %v1268 = vsub.s32 0, %v1267
      %v1269 = vrot.slane %v1254, %v1268
      %v1271 = vadd.f32 %v1261, %v1269
      %v1272 = vadd.f32 %v1262, %v1269
      %v1273 = vadd.f32 %v1263, %v1269
      %v1274 = vadd.f32 %v1264, %v1269
      %v1275 = vmax.f32 %v1271, -30.0
      %v1276 = vmax.f32 %v1272, -30.0
      %v1277 = vmax.f32 %v1273, -30.0
      %v1278 = vmax.f32 %v1274, -30.0
      %v1279 = vmin.f32 %v1275, 20.0
      %v1280 = vmin.f32 %v1276, 20.0
      %v1281 = vmin.f32 %v1277, 20.0
      %v1282 = vmin.f32 %v1278, 20.0
      %v1283 = vmul.f32 %v1279, 1.442695
      %v1284 = vpow.pop %v1283
      %v1285 = vmul.f32 %v1280, 1.442695
      %v1286 = vpow.pop %v1285
      %v1287 = vmul.f32 %v1281, 1.442695
      %v1288 = vpow.pop %v1287
      %v1289 = vmul.f32 %v1282, 1.442695
      %v1290 = vpow.pop %v1289
      %v1291 = vadd.f32 %v1284, 1.0
      %v1292 = vadd.f32 %v1286, 1.0
      %v1293 = vadd.f32 %v1288, 1.0
      %v1294 = vadd.f32 %v1290, 1.0
      %v1295 = vmul.f32 %v1291, %v1291
      %v1296 = vmul.f32 %v1292, %v1292
      %v1297 = vmul.f32 %v1293, %v1293
      %v1298 = vmul.f32 %v1294, %v1294
      %v1299 = vsub.f32 %v1295, 1.0
      %v1300 = vsub.f32 %v1296, 1.0
      %v1301 = vsub.f32 %v1297, 1.0
      %v1302 = vsub.f32 %v1298, 1.0
      %v1303 = vmul.f32 %v1271, %v1299
      %v1304 = vmul.f32 %v1272, %v1300
      %v1305 = vmul.f32 %v1273, %v1301
      %v1306 = vmul.f32 %v1274, %v1302
      %v1307 = vadd.f32 %v1295, 1.0
      %v1308 = vadd.f32 %v1296, 1.0
      %v1309 = vadd.f32 %v1297, 1.0
      %v1310 = vadd.f32 %v1298, 1.0
      %v1311 = vrcp.pop %v1307
      %v1312 = vrcp.pop %v1308
      %v1313 = vrcp.pop %v1309
      %v1314 = vrcp.pop %v1310
      %v1315 = vmul.f32 %v1303, %v1311
      %v1316 = vmul.f32 %v1304, %v1312
      %v1317 = vmul.f32 %v1305, %v1313
      %v1318 = vmul.f32 %v1306, %v1314
      %v1319 = vmul.f32 %v1315, %v331
      %v1320 = vmul.f32 %v1316, %v332
      %v1321 = vmul.f32 %v1317, %v333
      %v1322 = vmul.f32 %v1318, %v334
      %v1323 = vpack.c.bf16 %v1320, %v1319
      %v1324 = vpack.c.bf16 %v1322, %v1321
      %v1325 = vld [vmem:[%s8] sm:$0xf]
      %v1326 = vld [vmem:[%s8 + $0x4] sm:$0xf]
      %v1327 = vld [vmem:[%s8 + $0x8] sm:$0xf]
      %v1328 = vld [vmem:[%s8 + $0xc] sm:$0xf]
      %v1329 = vld [vmem:[%s8 + $0x10] sm:$0xf]
      %v1330 = vld [vmem:[%s8 + $0x14] sm:$0xf]
      %v1331 = vld [vmem:[%s8 + $0x18] sm:$0xf]
      %v1332 = vld [vmem:[%s8 + $0x1c] sm:$0xf]
      %v1333 = vld [vmem:[%s8 + $0x20] sm:$0xf]
      %v1334 = vld [vmem:[%s8 + $0x24] sm:$0xf]
      %v1335 = vld [vmem:[%s8 + $0x28] sm:$0xf]
      %v1336 = vld [vmem:[%s8 + $0x2c] sm:$0xf]
      %v1337 = vld [vmem:[%s8 + $0x30] sm:$0xf]
      %v1338 = vld [vmem:[%s8 + $0x34] sm:$0xf]
      %v1339 = vld [vmem:[%s8 + $0x38] sm:$0xf]
      %v1340 = vld [vmem:[%s8 + $0x3c] sm:$0xf]
      %v1341 = vld [vmem:[%s9] sm:$0x1]
      %v1343 = vlaneseq
      %v1344 = vshrl.u32 %v1343, 7
      %v1345 = vsub.s32 0, %v1344
      %v1346 = vrot.slane %v1341, %v1345
      %v1364 = vunpack.c.l.b16 %v1325
      %v1365 = vunpack.c.l.b16 %v1326
      %v1366 = vunpack.c.l.b16 %v1327
      %v1367 = vunpack.c.l.b16 %v1328
      %v1368 = vunpack.c.l.b16 %v1329
      %v1369 = vunpack.c.l.b16 %v1330
      %v1370 = vunpack.c.l.b16 %v1331
      %v1371 = vunpack.c.l.b16 %v1332
      %v1372 = vunpack.c.l.b16 %v1333
      %v1373 = vunpack.c.l.b16 %v1334
      %v1374 = vunpack.c.l.b16 %v1335
      %v1375 = vunpack.c.l.b16 %v1336
      %v1376 = vunpack.c.l.b16 %v1337
      %v1377 = vunpack.c.l.b16 %v1338
      %v1378 = vunpack.c.l.b16 %v1339
      %v1379 = vunpack.c.l.b16 %v1340
      %v1380 = vpack.c.b16 %v1365, %v1364
      %v1381 = vpack.c.b16 %v1367, %v1366
      %v1382 = vpack.c.b16 %v1369, %v1368
      %v1383 = vpack.c.b16 %v1371, %v1370
      %v1384 = vpack.c.b16 %v1373, %v1372
      %v1385 = vpack.c.b16 %v1375, %v1374
      %v1386 = vpack.c.b16 %v1377, %v1376
      %v1387 = vpack.c.b16 %v1379, %v1378
      %1396 = vmatprep.subr.bf16.mxu0 0
      %1397 = vmatpush1.bf16.msra.mxu0 %v1380
      %1398 = vmatprep.subr.bf16.mxu0 0
      %1399 = vmatpush1.bf16.msra.mxu0 %v1381
      %1400 = vmatprep.subr.bf16.mxu0 0
      %1401 = vmatpush1.bf16.msra.mxu0 %v1382
      %1402 = vmatprep.subr.bf16.mxu0 0
      %1403 = vmatpush1.bf16.msra.mxu0 %v1383
      %1404 = vmatprep.subr.bf16.mxu0 0
      %1405 = vmatpush1.bf16.msra.mxu0 %v1384
      %1406 = vmatprep.subr.bf16.mxu0 0
      %1407 = vmatpush1.bf16.msra.mxu0 %v1385
      %1408 = vmatprep.subr.bf16.mxu0 0
      %1409 = vmatpush1.bf16.msra.mxu0 %v1386
      %1410 = vmatprep.subr.bf16.mxu0 0
      %1411 = vmatpush1.bf16.msra.mxu0 %v1387
      %1412 = vmatprep.subr.bf16.mxu0 0
      %1413 = vmatpush1.bf16.msra.mxu0 0
      %1414 = vmatprep.subr.bf16.mxu0 0
      %1415 = vmatpush1.bf16.msra.mxu0 0
      %1416 = vmatprep.subr.bf16.mxu0 0
      %1417 = vmatpush1.bf16.msra.mxu0 0
      %1418 = vmatprep.subr.bf16.mxu0 0
      %1419 = vmatpush1.bf16.msra.mxu0 0
      %1420 = vmatprep.subr.bf16.mxu0 0
      %1421 = vmatpush1.bf16.msra.mxu0 0
      %1422 = vmatprep.subr.bf16.mxu0 0
      %1423 = vmatpush1.bf16.msra.mxu0 0
      %1424 = vmatprep.subr.bf16.mxu0 0
      %1425 = vmatpush1.bf16.msra.mxu0 0
      %1426 = vmatprep.subr.bf16.mxu0 0
      %1427 = vmatpush1.bf16.msra.mxu0 0
      %1428 = vmatprep.mubr.bf16.mxu0 0
      %1429 = vmatmul.mubr.bf16.gmra.mrb[0].mxu0 %v1323
      %v1430 = vpop.f32.mrb[0].mxu0
      %v1431 = vadd.f32 %v1346, %v1430
      %v1432 = vpop.f32.mrb[0].mxu0
      %v1433 = vpop.f32.mrb[0].mxu0
      %v1434 = vadd.f32 %v1346, %v1433
      %v1435 = vpop.f32.mrb[0].mxu0
      %1436 = vmatprep.mubr.bf16.mxu0 0
      %1437 = vmatmul.mubr.bf16.gmra.mrb[0].mxu0 %v1324
      %v1438 = vpop.f32.mrb[0].mxu0
      %v1439 = vadd.f32 %v1346, %v1438
      %v1440 = vpop.f32.mrb[0].mxu0
      %v1441 = vpop.f32.mrb[0].mxu0
      %v1442 = vadd.f32 %v1346, %v1441
      %v1443 = vpop.f32.mrb[0].mxu0
      %1444 = vdwg.mxu0
      %s1445 = sld [smem:[#allocation3 + %s28]]
      %v1446 = vstv %s1445
      %vm1447 = vcmp.lt.s32.totalorder %v318, %v1446
      %vm1448 = vcmp.lt.s32.totalorder %v319, %v1446
      %vm1449 = vcmp.lt.s32.totalorder %v320, %v1446
      %vm1450 = vcmp.lt.s32.totalorder %v321, %v1446
      %v1451 = vsel %vm1447, 1, 0
      %v1452 = vsel %vm1448, 1, 0
      %v1453 = vsel %vm1449, 1, 0
      %v1454 = vsel %vm1450, 1, 0
      %v1455 = vcvt.s32.f32 %v1451
      %v1456 = vcvt.s32.f32 %v1452
      %v1457 = vcvt.s32.f32 %v1453
      %v1458 = vcvt.s32.f32 %v1454
      %v1459 = vmul.f32 %v1431, %v1455
      %v1460 = vmul.f32 %v1434, %v1456
      %v1461 = vmul.f32 %v1439, %v1457
      %v1462 = vmul.f32 %v1442, %v1458
      %v1463 = vpack.c.bf16 %v1460, %v1459
      %v1464 = vpack.c.bf16 %v1462, %v1461
      %v1467 = vunpack.c.l.b16 %v1463
      %v1468 = vunpack.c.h.b16 %v1463
      %v1469 = vunpack.c.l.b16 %v1464
      %v1470 = vunpack.c.h.b16 %v1464
      %v1471 = vpack.c.b16 %v1467, %v1467
      %v1472 = vpack.c.b16 %v1468, %v1468
      %v1473 = vpack.c.b16 %v1469, %v1469
      %v1474 = vpack.c.b16 %v1470, %v1470
      %1479 = vst [vmem:[%s314] sm:$0xf] %v1471
      %1480 = vst [vmem:[%s314 + $0x4] sm:$0xf] %v1472
      %1481 = vst [vmem:[%s314 + $0x8] sm:$0xf] %v1473
      %1482 = vst [vmem:[%s314 + $0xc] sm:$0xf] %v1474
      %p1483 = scmp.lt.s32.totalorder %s28, 1
      %s1484 = scalar_select %p1483, %s28, 1
      %s1485 = smul.addr %s1484, 4
      %s1486 = smul.addr %s1485, 4
      %s1487 = scalar_lea.vmem %s10, %s1486
      // Predicated region
      $region53: #{_lambda_.1} parent=51 // pred_check
        %p1488 = pneg %p219
      $region54: #{_lambda_.1} parent=51 // pred_check_branch
        %1490 = sbr.rel (%p1488) target = $region56
      $region55: #{_lambda_.1} parent=51 // pred_region
        _
      $region56: #{_lambda_.1} parent=51 // pred_fallthru
        _
    $region52: #{_lambda_.1} parent=5 // pred_fallthru
      _
    %p1491 = scmp.le.s32.totalorder 2, %s23
    // Predicated region
    $region57: #{_lambda_.1} parent=5 // pred_check
      %p1492 = pneg %p1491
    $region58: #{_lambda_.1} parent=5 // pred_check_branch
      %1494 = sbr.rel (%p1492) target = $region60
    $region59: #{_lambda_.1} parent=5 // pred_region
      %s1495 = ssub.s32 %s23, 2
      // Predicated region
      $region61: #{_lambda_.1} parent=59 // pred_check
        %p1496 = pneg %p225
      $region62: #{_lambda_.1} parent=59 // pred_check_branch
        %1498 = sbr.rel (%p1496) target = $region64
      $region63: #{_lambda_.1} parent=59 // pred_region
        %p1499 = scmp.lt.s32.totalorder %s29, 1
        %s1500 = scalar_select %p1499, %s29, 1
        %s1501 = smul.addr %s1500, 4
        %s1502 = smul.addr %s1501, 4
        %s1503 = scalar_lea.vmem %s10, %s1502
      $region64: #{_lambda_.1} parent=59 // pred_fallthru
        _
    $region60: #{_lambda_.1} parent=5 // pred_fallthru
      _
  $region6: #{_lambda_.1} parent=0 // loop_footer
    %s27 = sadd.s32 1, %s23
  $region7: #{_lambda_.1} parent=0 // loop_footer_branch
    %22 = sbr.rel target = $region3
  $region8: #{_lambda_.1} parent=0 // loop_exit
    _

</llo_original>
